<compile_context>
chip_gen: v5e
topology: v5e:2x2
jax: 0.10.0
libtpu: 0.0.40
codegen_flags: <defaults>
</compile_context>

<pallas_src>
import functools

import jax
import jax.numpy as jnp
from jax.experimental import pallas as pl
from jax.experimental.pallas import tpu as pltpu

_ROW_TILE = 512     # 512–1024 rows ≈ HBM roofline on v6e; still fits v7x's 64 MiB VMEM
_LANE = 128         # lane-dense channel padding (unmasked vst, dense MXU tiles)
_BN_EPS = 1e-5


def _round_up(x, m):
    return (x + m - 1) // m * m


def _pad_axis(a, axis, new_size):
    pad = new_size - a.shape[axis]
    if pad <= 0:
        return a
    widths = [(0, 0)] * a.ndim
    widths[axis] = (0, pad)
    return jnp.pad(a, widths)


def _row_tiling(rows, row_tile):
    rt = row_tile if rows >= row_tile else _round_up(rows, 8)
    return rt, _round_up(rows, rt)


# ---------------------------------------------------------------------------
# Pallas kernels: 1x1 conv as [rows, Cin] x [Cin, Cout] matmul
# ---------------------------------------------------------------------------
def _matmul_bias_relu_kernel(x_ref, w_ref, b_ref, o_ref):
    acc = jnp.dot(x_ref[...], w_ref[...], preferred_element_type=jnp.float32)
    acc = acc + b_ref[...]                 # (1, Cout) bias broadcast over rows (f32)
    o_ref[...] = jnp.maximum(acc, 0.0).astype(o_ref.dtype)


def _add3_matmul_kernel(x_ref, y_ref, z_ref, w_ref, o_ref):
    s = x_ref[...] + y_ref[...] + z_ref[...]          # f32 VPU add (v5e friendly)
    o_ref[...] = jnp.dot(
        s, w_ref[...], preferred_element_type=jnp.float32).astype(o_ref.dtype)


def _add2_matmul_kernel(x_ref, y_ref, w_ref, o_ref):
    s = x_ref[...] + y_ref[...]
    o_ref[...] = jnp.dot(
        s, w_ref[...], preferred_element_type=jnp.float32).astype(o_ref.dtype)


_COMPILER_PARAMS = pltpu.CompilerParams(
    dimension_semantics=("parallel",),     # megacore: split row tiles across TCs (v7x)
    vmem_limit_bytes=48 << 20,             # leaves headroom under v7x's 64 MiB VMEM
)


def _conv1x1_bias_relu(x2d, w, b, *, row_tile=_ROW_TILE):
    """relu(x2d @ w + b): rows tiled on one 'parallel' axis, full weight resident."""
    rows, cin = x2d.shape
    cout = w.shape[1]
    cin_p, cout_p = _round_up(cin, _LANE), _round_up(cout, _LANE)
    rt, rows_p = _row_tiling(rows, row_tile)

    x_p = _pad_axis(_pad_axis(x2d, 1, cin_p), 0, rows_p)
    w_p = _pad_axis(_pad_axis(w, 0, cin_p), 1, cout_p)
    b_p = _pad_axis(b.reshape(1, -1), 1, cout_p)

    out = pl.pallas_call(
        _matmul_bias_relu_kernel,
        out_shape=jax.ShapeDtypeStruct((rows_p, cout_p), x2d.dtype),
        grid_spec=pltpu.PrefetchScalarGridSpec(
            num_scalar_prefetch=0,
            grid=(rows_p // rt,),
            in_specs=[
                pl.BlockSpec((rt, cin_p), lambda i: (i, 0)),
                pl.BlockSpec((cin_p, cout_p), lambda i: (0, 0)),  # weight: no re-DMA
                pl.BlockSpec((1, cout_p), lambda i: (0, 0)),      # folded-BN bias
            ],
            out_specs=pl.BlockSpec((rt, cout_p), lambda i: (i, 0)),
        ),
        compiler_params=_COMPILER_PARAMS,
    )(x_p, w_p, b_p)
    return out[:rows, :cout]


def _conv1x1_fused_add(xs, w, *, row_tile=_ROW_TILE):
    """(x0 + x1 [+ x2]) @ w — three-way add fused into the same Pallas matmul."""
    rows, cin = xs[0].shape
    cout = w.shape[1]
    cin_p, cout_p = _round_up(cin, _LANE), _round_up(cout, _LANE)
    rt, rows_p = _row_tiling(rows, row_tile)

    xs_p = [_pad_axis(_pad_axis(x, 1, cin_p), 0, rows_p) for x in xs]
    w_p = _pad_axis(_pad_axis(w, 0, cin_p), 1, cout_p)
    kernel = _add3_matmul_kernel if len(xs) == 3 else _add2_matmul_kernel

    x_spec = pl.BlockSpec((rt, cin_p), lambda i: (i, 0))
    out = pl.pallas_call(
        kernel,
        out_shape=jax.ShapeDtypeStruct((rows_p, cout_p), xs[0].dtype),
        grid_spec=pltpu.PrefetchScalarGridSpec(
            num_scalar_prefetch=0,
            grid=(rows_p // rt,),
            in_specs=[x_spec] * len(xs)
                     + [pl.BlockSpec((cin_p, cout_p), lambda i: (0, 0))],
            out_specs=pl.BlockSpec((rt, cout_p), lambda i: (i, 0)),
        ),
        compiler_params=_COMPILER_PARAMS,
    )(*xs_p, w_p)
    return out[:rows, :cout]


# ---------------------------------------------------------------------------
# Pure-JAX reference matmuls (for correctness check)
# ---------------------------------------------------------------------------
def _ref_conv1x1_bias_relu(x2d, w, b):
    return jnp.maximum(jnp.dot(x2d, w) + b[None, :], 0.0)


def _ref_conv1x1_fused_add(xs, w):
    s = xs[0]
    for t in xs[1:]:
        s = s + t
    return jnp.dot(s, w)


# ---------------------------------------------------------------------------
# Glue ops (plain JAX)
# ---------------------------------------------------------------------------
def _fold_bn(w, bn, eps=_BN_EPS):
    """Fold eval-mode BatchNorm into the 1x1-conv weight and a bias."""
    scale = bn["gamma"] / jnp.sqrt(bn["var"] + eps)
    return w * scale[None, :], bn["beta"] - bn["mean"] * scale


def _adaptive_avg_pool_2x2(x_nhwc):
    B, H, W, C = x_nhwc.shape
    rows = []
    for i in range(2):
        hs, he = (i * H) // 2, ((i + 1) * H + 1) // 2
        cols = []
        for j in range(2):
            ws, we = (j * W) // 2, ((j + 1) * W + 1) // 2
            cols.append(jnp.mean(x_nhwc[:, hs:he, ws:we, :], axis=(1, 2)))
        rows.append(jnp.stack(cols, axis=1))
    return jnp.stack(rows, axis=1)          # [B, 2, 2, C]


def _nearest_upsample(x_small, H, W):
    # TODO(synk): feed conv2 via a broadcast index_map on the 2x2 LFU tensor
    #             instead of materialising the full-resolution copy in HBM.
    B, h, w, C = x_small.shape
    hi = (jnp.arange(H) * h) // H
    wi = (jnp.arange(W) * w) // W
    return x_small[:, hi][:, :, wi]


def _fourier_unit(x_nhwc, w, b, conv_fn):
    """FourierUnit forward (NHWC). w: [2*Cin, 2*Cout] (BN folded), b: [2*Cout]."""
    B, H, W, C = x_nhwc.shape
    pad_h, pad_w = H % 2, W % 2
    if pad_h or pad_w:
        x_nhwc = jnp.pad(
            x_nhwc, ((0, 0), (0, pad_h), (0, pad_w), (0, 0)), mode="reflect")
    Hp, Wp = x_nhwc.shape[1], x_nhwc.shape[2]

    # TODO(synk): rfft2/irfft2 stay in XLA; there is no Pallas FFT primitive on TPU.
    ff = jnp.fft.rfft2(x_nhwc, axes=(1, 2), norm="ortho")      # [B,Hp,Wf,C] complex64
    Wf = ff.shape[2]
    # interleave (real, imag) per channel along lanes: lane 2c = real, 2c+1 = imag
    slab = jnp.stack([ff.real, ff.imag], axis=-1).astype(x_nhwc.dtype)
    slab = slab.reshape(B * Hp * Wf, 2 * C)

    out2d = conv_fn(slab, w, b)                                # 1x1 conv + BN + ReLU
    cout = w.shape[1] // 2
    out = out2d.reshape(B, Hp, Wf, cout, 2)
    ff_out = jax.lax.complex(out[..., 0], out[..., 1])
    y = jnp.fft.irfft2(ff_out, s=(Hp, Wp), axes=(1, 2), norm="ortho")
    return y[:, :H, :W, :].astype(x_nhwc.dtype)


# ---------------------------------------------------------------------------
# SpectralTransform forward
# ---------------------------------------------------------------------------
def spectral_transform(params, x_nchw, *, stride=1, enable_lfu=True, use_pallas=True):
    conv_bias_relu = _conv1x1_bias_relu if use_pallas else _ref_conv1x1_bias_relu
    conv_fused_add = _conv1x1_fused_add if use_pallas else _ref_conv1x1_fused_add

    # NCHW -> NHWC exactly once; stay channels-last until the final transpose.
    x = jnp.transpose(x_nchw, (0, 2, 3, 1))
    if stride == 2:                         # AvgPool2d(kernel=2, stride=2)
        B, H, W, C = x.shape
        x = x[:, : (H // 2) * 2, : (W // 2) * 2, :]
        x = x.reshape(B, H // 2, 2, W // 2, 2, C).mean(axis=(2, 4))

    B, H, W, Cin = x.shape

    # conv1: 1x1 conv + BN + ReLU (BN folded into weight/bias outside the kernel)
    w1, b1 = _fold_bn(params["conv1_w"], params["conv1_bn"])
    c_half = w1.shape[1]
    h2d = conv_bias_relu(x.reshape(B * H * W, Cin), w1, b1)
    h_nhwc = h2d.reshape(B, H, W, c_half)

    # global Fourier unit
    wf, bf = _fold_bn(params["fu_w"], params["fu_bn"])
    fu_out = _fourier_unit(h_nhwc, wf, bf, conv_bias_relu)

    slabs = [h2d, fu_out.reshape(B * H * W, c_half)]
    if enable_lfu:
        wl, bl = _fold_bn(params["lfu_w"], params["lfu_bn"])
        pooled = _adaptive_avg_pool_2x2(h_nhwc)
        lfu_small = _fourier_unit(pooled, wl, bl, conv_bias_relu)
        lfu_out = _nearest_upsample(lfu_small, H, W)
        slabs.append(lfu_out.reshape(B * H * W, c_half))

    # conv2: (x + fu + lfu) @ W fused in a single Pallas pass (each operand read once)
    out2d = conv_fused_add(slabs, params["conv2_w"])
    out = out2d.reshape(B, H, W, params["conv2_w"].shape[1])
    return jnp.transpose(out, (0, 3, 1, 2))  # back to NCHW


# ---------------------------------------------------------------------------
# Parameter construction (eval-mode BN running stats, 1x1 conv weights)
# ---------------------------------------------------------------------------
def init_spectral_transform_params(key, in_channels, out_channels,
                                   enable_lfu=True, dtype=jnp.float32):
    c_half = out_channels // 2
    ks = jax.random.split(key, 6)

    def conv_w(k, cin, cout):
        # stored directly in matmul layout [Cin, Cout]
        return jax.random.normal(k, (cin, cout), dtype) * (2.0 / cin) ** 0.5

    def bn_params(k, c):
        k1, k2, k3, k4 = jax.random.split(k, 4)
        return dict(
            gamma=jax.random.uniform(k1, (c,), dtype, 0.5, 1.5),
            beta=0.1 * jax.random.normal(k2, (c,), dtype),
            mean=0.1 * jax.random.normal(k3, (c,), dtype),
            var=jnp.abs(jax.random.normal(k4, (c,), dtype)) * 0.5 + 0.5,
        )

    params = dict(
        conv1_w=conv_w(ks[0], in_channels, c_half),
        conv1_bn=bn_params(ks[1], c_half),
        fu_w=conv_w(ks[2], 2 * c_half, 2 * c_half),
        fu_bn=bn_params(ks[3], 2 * c_half),
        conv2_w=conv_w(ks[4], c_half, out_channels),
    )
    if enable_lfu:
        kl1, kl2 = jax.random.split(ks[5])
        params["lfu_w"] = conv_w(kl1, 2 * c_half, 2 * c_half)
        params["lfu_bn"] = bn_params(kl2, 2 * c_half)
    return params


if __name__ == "__main__":
    key = jax.random.PRNGKey(0)
    k_params, k_x = jax.random.split(key)

    B, C_IN, H, W = 2, 4, 16, 16
    C_OUT = 8

    params = init_spectral_transform_params(k_params, C_IN, C_OUT, enable_lfu=True)
    x = jax.random.normal(k_x, (B, C_IN, H, W), jnp.float32)

    fwd = jax.jit(functools.partial(spectral_transform, stride=1,
                                    enable_lfu=True, use_pallas=True))
    out = jax.block_until_ready(fwd(params, x))
    assert out.shape == (B, C_OUT, H, W), out.shape

    # pure-JAX reference (same math, plain matmuls) for a correctness check
    ref_fwd = jax.jit(functools.partial(spectral_transform, stride=1,
                                        enable_lfu=True, use_pallas=False))
    ref = jax.block_until_ready(ref_fwd(params, x))

    max_err = float(jnp.max(jnp.abs(out - ref)))
    if not bool(jnp.allclose(out, ref, rtol=1e-2, atol=1e-2)):
        raise AssertionError(f"Pallas/reference mismatch: max |err| = {max_err:.3e}")
    print("KERNEL_OK")
</pallas_src>

<mosaic_0001>
module attributes {stable_mosaic.version = 11 : i64} {
  func.func @_matmul_bias_relu_kernel(%arg0: i32, %arg1: memref<512x128xf32, #tpu.memory_space<vmem>>, %arg2: memref<128x128xf32, #tpu.memory_space<vmem>>, %arg3: memref<1x128xf32, #tpu.memory_space<vmem>>, %arg4: memref<512x128xf32, #tpu.memory_space<vmem>>) attributes {dimension_semantics = [#tpu.dimension_semantics<parallel>], iteration_bounds = array<i64: 1>, scalar_prefetch = 0 : i64, scratch_operands = 0 : i64, tpu.core_type = #tpu.core_type<tc>, window_params = [{transform_indices = @transform_0, window_bounds = array<i64: 512, 128>}, {pipeline_mode = #tpu.pipeline_mode<synchronous>, transform_indices = @transform_1, window_bounds = array<i64: 128, 128>}, {pipeline_mode = #tpu.pipeline_mode<synchronous>, transform_indices = @transform_2, window_bounds = array<i64: 1, 128>}, {transform_indices = @transform_3, window_bounds = array<i64: 512, 128>}]} {
    %c0 = arith.constant 0 : index
    %c0_0 = arith.constant 0 : index
    %0 = vector.load %arg1[%c0, %c0_0] : memref<512x128xf32, #tpu.memory_space<vmem>>, vector<512x128xf32>
    %c0_1 = arith.constant 0 : index
    %c0_2 = arith.constant 0 : index
    %1 = vector.load %arg2[%c0_1, %c0_2] : memref<128x128xf32, #tpu.memory_space<vmem>>, vector<128x128xf32>
    %cst = arith.constant dense<0.000000e+00> : vector<512x128xf32>
    %2 = tpu.matmul %0, %1, %cst {dimension_numbers = #tpu.dot_dimension_numbers<[1], [0], [0], [1], [0, 0, 1, 1], [], []>} : vector<512x128xf32>, vector<128x128xf32>, vector<512x128xf32> -> vector<512x128xf32>
    %c0_3 = arith.constant 0 : index
    %c0_4 = arith.constant 0 : index
    %3 = vector.load %arg3[%c0_3, %c0_4] : memref<1x128xf32, #tpu.memory_space<vmem>>, vector<1x128xf32>
    %4 = vector.broadcast %3 : vector<1x128xf32> to vector<512x128xf32>
    %5 = arith.addf %2, %4 : vector<512x128xf32>
    %cst_5 = arith.constant 0.000000e+00 : f32
    %6 = vector.broadcast %cst_5 : f32 to vector<512x128xf32>
    %7 = arith.maximumf %5, %6 : vector<512x128xf32>
    %c0_6 = arith.constant 0 : index
    %c0_7 = arith.constant 0 : index
    %8 = vector.load %arg4[%c0_6, %c0_7] : memref<512x128xf32, #tpu.memory_space<vmem>>, vector<512x128xf32>
    tpu.vector_store %arg4[%c0_6, %c0_7], %7 {strides = array<i32>} : memref<512x128xf32, #tpu.memory_space<vmem>>, vector<512x128xf32>,
    return
  }
  func.func @transform_0(%arg0: i32) -> (i32, i32) {
    %c0_i32 = arith.constant 0 : i32
    %c0_i32_0 = arith.constant 0 : i32
    return %arg0, %c0_i32 : i32, i32
  }
  func.func @transform_1(%arg0: i32) -> (i32, i32) {
    %c0_i32 = arith.constant 0 : i32
    %c0_i32_0 = arith.constant 0 : i32
    %c0_i32_1 = arith.constant 0 : i32
    return %c0_i32, %c0_i32_0 : i32, i32
  }
  func.func @transform_2(%arg0: i32) -> (i32, i32) {
    %c0_i32 = arith.constant 0 : i32
    %c0_i32_0 = arith.constant 0 : i32
    %c0_i32_1 = arith.constant 0 : i32
    return %c0_i32, %c0_i32_0 : i32, i32
  }
  func.func @transform_3(%arg0: i32) -> (i32, i32) {
    %c0_i32 = arith.constant 0 : i32
    %c0_i32_0 = arith.constant 0 : i32
    return %arg0, %c0_i32 : i32, i32
  }
}

module attributes {stable_mosaic.version = 11 : i64} {
  func.func @_matmul_bias_relu_kernel(%arg0: i32, %arg1: memref<8x128xf32, #tpu.memory_space<vmem>>, %arg2: memref<128x128xf32, #tpu.memory_space<vmem>>, %arg3: memref<1x128xf32, #tpu.memory_space<vmem>>, %arg4: memref<8x128xf32, #tpu.memory_space<vmem>>) attributes {dimension_semantics = [#tpu.dimension_semantics<parallel>], iteration_bounds = array<i64: 1>, scalar_prefetch = 0 : i64, scratch_operands = 0 : i64, tpu.core_type = #tpu.core_type<tc>, window_params = [{transform_indices = @transform_0, window_bounds = array<i64: 8, 128>}, {pipeline_mode = #tpu.pipeline_mode<synchronous>, transform_indices = @transform_1, window_bounds = array<i64: 128, 128>}, {pipeline_mode = #tpu.pipeline_mode<synchronous>, transform_indices = @transform_2, window_bounds = array<i64: 1, 128>}, {transform_indices = @transform_3, window_bounds = array<i64: 8, 128>}]} {
    %c0 = arith.constant 0 : index
    %c0_0 = arith.constant 0 : index
    %0 = vector.load %arg1[%c0, %c0_0] : memref<8x128xf32, #tpu.memory_space<vmem>>, vector<8x128xf32>
    %c0_1 = arith.constant 0 : index
    %c0_2 = arith.constant 0 : index
    %1 = vector.load %arg2[%c0_1, %c0_2] : memref<128x128xf32, #tpu.memory_space<vmem>>, vector<128x128xf32>
    %cst = arith.constant dense<0.000000e+00> : vector<8x128xf32>
    %2 = tpu.matmul %0, %1, %cst {dimension_numbers = #tpu.dot_dimension_numbers<[1], [0], [0], [1], [0, 0, 1, 1], [], []>} : vector<8x128xf32>, vector<128x128xf32>, vector<8x128xf32> -> vector<8x128xf32>
    %c0_3 = arith.constant 0 : index
    %c0_4 = arith.constant 0 : index
    %3 = vector.load %arg3[%c0_3, %c0_4] : memref<1x128xf32, #tpu.memory_space<vmem>>, vector<1x128xf32>
    %4 = vector.broadcast %3 : vector<1x128xf32> to vector<8x128xf32>
    %5 = arith.addf %2, %4 : vector<8x128xf32>
    %cst_5 = arith.constant 0.000000e+00 : f32
    %6 = vector.broadcast %cst_5 : f32 to vector<8x128xf32>
    %7 = arith.maximumf %5, %6 : vector<8x128xf32>
    %c0_6 = arith.constant 0 : index
    %c0_7 = arith.constant 0 : index
    %8 = vector.load %arg4[%c0_6, %c0_7] : memref<8x128xf32, #tpu.memory_space<vmem>>, vector<8x128xf32>
    tpu.vector_store %arg4[%c0_6, %c0_7], %7 {strides = array<i32>} : memref<8x128xf32, #tpu.memory_space<vmem>>, vector<8x128xf32>,
    return
  }
  func.func @transform_0(%arg0: i32) -> (i32, i32) {
    %c0_i32 = arith.constant 0 : i32
    %c0_i32_0 = arith.constant 0 : i32
    return %arg0, %c0_i32 : i32, i32
  }
  func.func @transform_1(%arg0: i32) -> (i32, i32) {
    %c0_i32 = arith.constant 0 : i32
    %c0_i32_0 = arith.constant 0 : i32
    %c0_i32_1 = arith.constant 0 : i32
    return %c0_i32, %c0_i32_0 : i32, i32
  }
  func.func @transform_2(%arg0: i32) -> (i32, i32) {
    %c0_i32 = arith.constant 0 : i32
    %c0_i32_0 = arith.constant 0 : i32
    %c0_i32_1 = arith.constant 0 : i32
    return %c0_i32, %c0_i32_0 : i32, i32
  }
  func.func @transform_3(%arg0: i32) -> (i32, i32) {
    %c0_i32 = arith.constant 0 : i32
    %c0_i32_0 = arith.constant 0 : i32
    return %arg0, %c0_i32 : i32, i32
  }
}

module attributes {stable_mosaic.version = 11 : i64} {
  func.func @_matmul_bias_relu_kernel(%arg0: i32, %arg1: memref<288x128xf32, #tpu.memory_space<vmem>>, %arg2: memref<128x128xf32, #tpu.memory_space<vmem>>, %arg3: memref<1x128xf32, #tpu.memory_space<vmem>>, %arg4: memref<288x128xf32, #tpu.memory_space<vmem>>) attributes {dimension_semantics = [#tpu.dimension_semantics<parallel>], iteration_bounds = array<i64: 1>, scalar_prefetch = 0 : i64, scratch_operands = 0 : i64, tpu.core_type = #tpu.core_type<tc>, window_params = [{transform_indices = @transform_0, window_bounds = array<i64: 288, 128>}, {pipeline_mode = #tpu.pipeline_mode<synchronous>, transform_indices = @transform_1, window_bounds = array<i64: 128, 128>}, {pipeline_mode = #tpu.pipeline_mode<synchronous>, transform_indices = @transform_2, window_bounds = array<i64: 1, 128>}, {transform_indices = @transform_3, window_bounds = array<i64: 288, 128>}]} {
    %c0 = arith.constant 0 : index
    %c0_0 = arith.constant 0 : index
    %0 = vector.load %arg1[%c0, %c0_0] : memref<288x128xf32, #tpu.memory_space<vmem>>, vector<288x128xf32>
    %c0_1 = arith.constant 0 : index
    %c0_2 = arith.constant 0 : index
    %1 = vector.load %arg2[%c0_1, %c0_2] : memref<128x128xf32, #tpu.memory_space<vmem>>, vector<128x128xf32>
    %cst = arith.constant dense<0.000000e+00> : vector<288x128xf32>
    %2 = tpu.matmul %0, %1, %cst {dimension_numbers = #tpu.dot_dimension_numbers<[1], [0], [0], [1], [0, 0, 1, 1], [], []>} : vector<288x128xf32>, vector<128x128xf32>, vector<288x128xf32> -> vector<288x128xf32>
    %c0_3 = arith.constant 0 : index
    %c0_4 = arith.constant 0 : index
    %3 = vector.load %arg3[%c0_3, %c0_4] : memref<1x128xf32, #tpu.memory_space<vmem>>, vector<1x128xf32>
    %4 = vector.broadcast %3 : vector<1x128xf32> to vector<288x128xf32>
    %5 = arith.addf %2, %4 : vector<288x128xf32>
    %cst_5 = arith.constant 0.000000e+00 : f32
    %6 = vector.broadcast %cst_5 : f32 to vector<288x128xf32>
    %7 = arith.maximumf %5, %6 : vector<288x128xf32>
    %c0_6 = arith.constant 0 : index
    %c0_7 = arith.constant 0 : index
    %8 = vector.load %arg4[%c0_6, %c0_7] : memref<288x128xf32, #tpu.memory_space<vmem>>, vector<288x128xf32>
    tpu.vector_store %arg4[%c0_6, %c0_7], %7 {strides = array<i32>} : memref<288x128xf32, #tpu.memory_space<vmem>>, vector<288x128xf32>,
    return
  }
  func.func @transform_0(%arg0: i32) -> (i32, i32) {
    %c0_i32 = arith.constant 0 : i32
    %c0_i32_0 = arith.constant 0 : i32
    return %arg0, %c0_i32 : i32, i32
  }
  func.func @transform_1(%arg0: i32) -> (i32, i32) {
    %c0_i32 = arith.constant 0 : i32
    %c0_i32_0 = arith.constant 0 : i32
    %c0_i32_1 = arith.constant 0 : i32
    return %c0_i32, %c0_i32_0 : i32, i32
  }
  func.func @transform_2(%arg0: i32) -> (i32, i32) {
    %c0_i32 = arith.constant 0 : i32
    %c0_i32_0 = arith.constant 0 : i32
    %c0_i32_1 = arith.constant 0 : i32
    return %c0_i32, %c0_i32_0 : i32, i32
  }
  func.func @transform_3(%arg0: i32) -> (i32, i32) {
    %c0_i32 = arith.constant 0 : i32
    %c0_i32_0 = arith.constant 0 : i32
    return %arg0, %c0_i32 : i32, i32
  }
}

module attributes {stable_mosaic.version = 11 : i64} {
  func.func @_add3_matmul_kernel(%arg0: i32, %arg1: memref<512x128xf32, #tpu.memory_space<vmem>>, %arg2: memref<512x128xf32, #tpu.memory_space<vmem>>, %arg3: memref<512x128xf32, #tpu.memory_space<vmem>>, %arg4: memref<128x128xf32, #tpu.memory_space<vmem>>, %arg5: memref<512x128xf32, #tpu.memory_space<vmem>>) attributes {dimension_semantics = [#tpu.dimension_semantics<parallel>], iteration_bounds = array<i64: 1>, scalar_prefetch = 0 : i64, scratch_operands = 0 : i64, tpu.core_type = #tpu.core_type<tc>, window_params = [{transform_indices = @transform_0, window_bounds = array<i64: 512, 128>}, {transform_indices = @transform_1, window_bounds = array<i64: 512, 128>}, {transform_indices = @transform_2, window_bounds = array<i64: 512, 128>}, {pipeline_mode = #tpu.pipeline_mode<synchronous>, transform_indices = @transform_3, window_bounds = array<i64: 128, 128>}, {transform_indices = @transform_4, window_bounds = array<i64: 512, 128>}]} {
    %c0 = arith.constant 0 : index
    %c0_0 = arith.constant 0 : index
    %0 = vector.load %arg1[%c0, %c0_0] : memref<512x128xf32, #tpu.memory_space<vmem>>, vector<512x128xf32>
    %c0_1 = arith.constant 0 : index
    %c0_2 = arith.constant 0 : index
    %1 = vector.load %arg2[%c0_1, %c0_2] : memref<512x128xf32, #tpu.memory_space<vmem>>, vector<512x128xf32>
    %2 = arith.addf %0, %1 : vector<512x128xf32>
    %c0_3 = arith.constant 0 : index
    %c0_4 = arith.constant 0 : index
    %3 = vector.load %arg3[%c0_3, %c0_4] : memref<512x128xf32, #tpu.memory_space<vmem>>, vector<512x128xf32>
    %4 = arith.addf %2, %3 : vector<512x128xf32>
    %c0_5 = arith.constant 0 : index
    %c0_6 = arith.constant 0 : index
    %5 = vector.load %arg4[%c0_5, %c0_6] : memref<128x128xf32, #tpu.memory_space<vmem>>, vector<128x128xf32>
    %cst = arith.constant dense<0.000000e+00> : vector<512x128xf32>
    %6 = tpu.matmul %4, %5, %cst {dimension_numbers = #tpu.dot_dimension_numbers<[1], [0], [0], [1], [0, 0, 1, 1], [], []>} : vector<512x128xf32>, vector<128x128xf32>, vector<512x128xf32> -> vector<512x128xf32>
    %c0_7 = arith.constant 0 : index
    %c0_8 = arith.constant 0 : index
    %7 = vector.load %arg5[%c0_7, %c0_8] : memref<512x128xf32, #tpu.memory_space<vmem>>, vector<512x128xf32>
    tpu.vector_store %arg5[%c0_7, %c0_8], %6 {strides = array<i32>} : memref<512x128xf32, #tpu.memory_space<vmem>>, vector<512x128xf32>,
    return
  }
  func.func @transform_0(%arg0: i32) -> (i32, i32) {
    %c0_i32 = arith.constant 0 : i32
    %c0_i32_0 = arith.constant 0 : i32
    return %arg0, %c0_i32 : i32, i32
  }
  func.func @transform_1(%arg0: i32) -> (i32, i32) {
    %c0_i32 = arith.constant 0 : i32
    %c0_i32_0 = arith.constant 0 : i32
    return %arg0, %c0_i32 : i32, i32
  }
  func.func @transform_2(%arg0: i32) -> (i32, i32) {
    %c0_i32 = arith.constant 0 : i32
    %c0_i32_0 = arith.constant 0 : i32
    return %arg0, %c0_i32 : i32, i32
  }
  func.func @transform_3(%arg0: i32) -> (i32, i32) {
    %c0_i32 = arith.constant 0 : i32
    %c0_i32_0 = arith.constant 0 : i32
    %c0_i32_1 = arith.constant 0 : i32
    return %c0_i32, %c0_i32_0 : i32, i32
  }
  func.func @transform_4(%arg0: i32) -> (i32, i32) {
    %c0_i32 = arith.constant 0 : i32
    %c0_i32_0 = arith.constant 0 : i32
    return %arg0, %c0_i32 : i32, i32
  }
}

</mosaic_0001>

<llo_original>
// kernel: spectral_transform.4
$region0: #{spectral_transform.4}
  #allocation0 [shape = 'u32[]', space=smem, size = 0x4, offset = 0x4, fixed_abs, tag = 'smem constant byte address 0x4 - core index']
  #allocation1 [shape = 'u32[72,128]{1,0:T(1,128)}', space=vmem, size = 0x9000, scoped, tag = 'internal scratch']
  %s0 = inlined_call_operand.vmem [shape: f32[512,128], index: 0, kind: input, shape index: {}]
  %s1 = inlined_call_operand.vmem [shape: f32[128,128], index: 1, kind: input, shape index: {}]
  %s2 = inlined_call_operand.vmem [shape: f32[1,128], index: 2, kind: input, shape index: {}]
  %s3 = inlined_call_operand.vmem [shape: f32[512,128], index: 3, kind: output, shape index: {}]
  %s4 = sld [smem:[#allocation0]]
  $region22: #{spectral_transform.4} parent=0
    _
  %s6 = ssub.s32 1, %s4
  %s7 = scalar_select 0, %s6, %s4
  // Predicated region
  $region2: #{spectral_transform.4} parent=0 // pred_check
    _
  $region3: #{spectral_transform.4} parent=0 // pred_check_branch
    %9 = sbr.rel (0) target = $region5
  $region4: #{spectral_transform.4} parent=0 // pred_region
    _
  $region5: #{spectral_transform.4} parent=0 // pred_fallthru
    _
  // Predicated region
  $region6: #{spectral_transform.4} parent=0 // pred_check
    _
  $region7: #{spectral_transform.4} parent=0 // pred_check_branch
    %11 = sbr.rel (0) target = $region9
  $region8: #{spectral_transform.4} parent=0 // pred_region
    _
  $region9: #{spectral_transform.4} parent=0 // pred_fallthru
    _
  // Predicated region
  $region10: #{spectral_transform.4} parent=0 // pred_check
    _
  $region11: #{spectral_transform.4} parent=0 // pred_check_branch
    %13 = sbr.rel (0) target = $region13
  $region12: #{spectral_transform.4} parent=0 // pred_region
    _
  $region13: #{spectral_transform.4} parent=0 // pred_fallthru
    _
  %v14 = vld [vmem:[%s0] sm:$0xff]
  %v15 = vld [vmem:[%s0 + $0x8] sm:$0xff]
  %v16 = vld [vmem:[%s0 + $0x10] sm:$0xff]
  %v17 = vld [vmem:[%s0 + $0x18] sm:$0xff]
  %v18 = vld [vmem:[%s0 + $0x20] sm:$0xff]
  %v19 = vld [vmem:[%s0 + $0x28] sm:$0xff]
  %v20 = vld [vmem:[%s0 + $0x30] sm:$0xff]
  %v21 = vld [vmem:[%s0 + $0x38] sm:$0xff]
  %v22 = vld [vmem:[%s0 + $0x40] sm:$0xff]
  %v23 = vld [vmem:[%s0 + $0x48] sm:$0xff]
  %v24 = vld [vmem:[%s0 + $0x50] sm:$0xff]
  %v25 = vld [vmem:[%s0 + $0x58] sm:$0xff]
  %v26 = vld [vmem:[%s0 + $0x60] sm:$0xff]
  %v27 = vld [vmem:[%s0 + $0x68] sm:$0xff]
  %v28 = vld [vmem:[%s0 + $0x70] sm:$0xff]
  %v29 = vld [vmem:[%s0 + $0x78] sm:$0xff]
  %v30 = vld [vmem:[%s0 + $0x80] sm:$0xff]
  %v31 = vld [vmem:[%s0 + $0x88] sm:$0xff]
  %v32 = vld [vmem:[%s0 + $0x90] sm:$0xff]
  %v33 = vld [vmem:[%s0 + $0x98] sm:$0xff]
  %v34 = vld [vmem:[%s0 + $0xa0] sm:$0xff]
  %v35 = vld [vmem:[%s0 + $0xa8] sm:$0xff]
  %v36 = vld [vmem:[%s0 + $0xb0] sm:$0xff]
  %v37 = vld [vmem:[%s0 + $0xb8] sm:$0xff]
  %v38 = vld [vmem:[%s0 + $0xc0] sm:$0xff]
  %v39 = vld [vmem:[%s0 + $0xc8] sm:$0xff]
  %v40 = vld [vmem:[%s0 + $0xd0] sm:$0xff]
  %v41 = vld [vmem:[%s0 + $0xd8] sm:$0xff]
  %v42 = vld [vmem:[%s0 + $0xe0] sm:$0xff]
  %v43 = vld [vmem:[%s0 + $0xe8] sm:$0xff]
  %v44 = vld [vmem:[%s0 + $0xf0] sm:$0xff]
  %v45 = vld [vmem:[%s0 + $0xf8] sm:$0xff]
  %v46 = vld [vmem:[%s0 + $0x100] sm:$0xff]
  %v47 = vld [vmem:[%s0 + $0x108] sm:$0xff]
  %v48 = vld [vmem:[%s0 + $0x110] sm:$0xff]
  %v49 = vld [vmem:[%s0 + $0x118] sm:$0xff]
  %v50 = vld [vmem:[%s0 + $0x120] sm:$0xff]
  %v51 = vld [vmem:[%s0 + $0x128] sm:$0xff]
  %v52 = vld [vmem:[%s0 + $0x130] sm:$0xff]
  %v53 = vld [vmem:[%s0 + $0x138] sm:$0xff]
  %v54 = vld [vmem:[%s0 + $0x140] sm:$0xff]
  %v55 = vld [vmem:[%s0 + $0x148] sm:$0xff]
  %v56 = vld [vmem:[%s0 + $0x150] sm:$0xff]
  %v57 = vld [vmem:[%s0 + $0x158] sm:$0xff]
  %v58 = vld [vmem:[%s0 + $0x160] sm:$0xff]
  %v59 = vld [vmem:[%s0 + $0x168] sm:$0xff]
  %v60 = vld [vmem:[%s0 + $0x170] sm:$0xff]
  %v61 = vld [vmem:[%s0 + $0x178] sm:$0xff]
  %v62 = vld [vmem:[%s0 + $0x180] sm:$0xff]
  %v63 = vld [vmem:[%s0 + $0x188] sm:$0xff]
  %v64 = vld [vmem:[%s0 + $0x190] sm:$0xff]
  %v65 = vld [vmem:[%s0 + $0x198] sm:$0xff]
  %v66 = vld [vmem:[%s0 + $0x1a0] sm:$0xff]
  %v67 = vld [vmem:[%s0 + $0x1a8] sm:$0xff]
  %v68 = vld [vmem:[%s0 + $0x1b0] sm:$0xff]
  %v69 = vld [vmem:[%s0 + $0x1b8] sm:$0xff]
  %v70 = vld [vmem:[%s0 + $0x1c0] sm:$0xff]
  %v71 = vld [vmem:[%s0 + $0x1c8] sm:$0xff]
  %v72 = vld [vmem:[%s0 + $0x1d0] sm:$0xff]
  %v73 = vld [vmem:[%s0 + $0x1d8] sm:$0xff]
  %v74 = vld [vmem:[%s0 + $0x1e0] sm:$0xff]
  %v75 = vld [vmem:[%s0 + $0x1e8] sm:$0xff]
  %v76 = vld [vmem:[%s0 + $0x1f0] sm:$0xff]
  %v77 = vld [vmem:[%s0 + $0x1f8] sm:$0xff]
  %v78 = vld [vmem:[%s1] sm:$0xff]
  %v79 = vld [vmem:[%s1 + $0x8] sm:$0xff]
  %v80 = vld [vmem:[%s1 + $0x10] sm:$0xff]
  %v81 = vld [vmem:[%s1 + $0x18] sm:$0xff]
  %v82 = vld [vmem:[%s1 + $0x20] sm:$0xff]
  %v83 = vld [vmem:[%s1 + $0x28] sm:$0xff]
  %v84 = vld [vmem:[%s1 + $0x30] sm:$0xff]
  %v85 = vld [vmem:[%s1 + $0x38] sm:$0xff]
  %v86 = vld [vmem:[%s1 + $0x40] sm:$0xff]
  %v87 = vld [vmem:[%s1 + $0x48] sm:$0xff]
  %v88 = vld [vmem:[%s1 + $0x50] sm:$0xff]
  %v89 = vld [vmem:[%s1 + $0x58] sm:$0xff]
  %v90 = vld [vmem:[%s1 + $0x60] sm:$0xff]
  %v91 = vld [vmem:[%s1 + $0x68] sm:$0xff]
  %v92 = vld [vmem:[%s1 + $0x70] sm:$0xff]
  %v93 = vld [vmem:[%s1 + $0x78] sm:$0xff]
  %v94 = vld [vmem:[%s2] sm:$0x1]
  %v96 = vperm.slane %v94, 0
  %98 = vmatpush.msra.mxu0 %v93
  %99 = vmatpush.msra.mxu0 %v92
  %100 = vmatpush.msra.mxu0 %v91
  %101 = vmatpush.msra.mxu0 %v90
  %102 = vmatpush.msra.mxu0 %v89
  %103 = vmatpush.msra.mxu0 %v88
  %104 = vmatpush.msra.mxu0 %v87
  %105 = vmatpush.msra.mxu0 %v86
  %106 = vmatpush.msra.mxu0 %v85
  %107 = vmatpush.msra.mxu0 %v84
  %108 = vmatpush.msra.mxu0 %v83
  %109 = vmatpush.msra.mxu0 %v82
  %110 = vmatpush.msra.mxu0 %v81
  %111 = vmatpush.msra.mxu0 %v80
  %112 = vmatpush.msra.mxu0 %v79
  %113 = vmatpush.msra.mxu0 %v78
  %114 = vmatmul.f32.gmra.mxu0 %v14
  %v115 = vpop.f32.mrf.mxu0
  %v116 = vadd.f32 %v96, %v115
  %117 = vmatmul.f32.gmra.mxu0 %v15
  %v118 = vpop.f32.mrf.mxu0
  %v119 = vadd.f32 %v96, %v118
  %120 = vmatmul.f32.gmra.mxu0 %v16
  %v121 = vpop.f32.mrf.mxu0
  %v122 = vadd.f32 %v96, %v121
  %123 = vmatmul.f32.gmra.mxu0 %v17
  %v124 = vpop.f32.mrf.mxu0
  %v125 = vadd.f32 %v96, %v124
  %126 = vmatmul.f32.gmra.mxu0 %v18
  %v127 = vpop.f32.mrf.mxu0
  %v128 = vadd.f32 %v96, %v127
  %129 = vmatmul.f32.gmra.mxu0 %v19
  %v130 = vpop.f32.mrf.mxu0
  %v131 = vadd.f32 %v96, %v130
  %132 = vmatmul.f32.gmra.mxu0 %v20
  %v133 = vpop.f32.mrf.mxu0
  %v134 = vadd.f32 %v96, %v133
  %135 = vmatmul.f32.gmra.mxu0 %v21
  %v136 = vpop.f32.mrf.mxu0
  %v137 = vadd.f32 %v96, %v136
  %138 = vmatmul.f32.gmra.mxu0 %v22
  %v139 = vpop.f32.mrf.mxu0
  %v140 = vadd.f32 %v96, %v139
  %141 = vmatmul.f32.gmra.mxu0 %v23
  %v142 = vpop.f32.mrf.mxu0
  %v143 = vadd.f32 %v96, %v142
  %144 = vmatmul.f32.gmra.mxu0 %v24
  %v145 = vpop.f32.mrf.mxu0
  %v146 = vadd.f32 %v96, %v145
  %147 = vmatmul.f32.gmra.mxu0 %v25
  %v148 = vpop.f32.mrf.mxu0
  %v149 = vadd.f32 %v96, %v148
  %150 = vmatmul.f32.gmra.mxu0 %v26
  %v151 = vpop.f32.mrf.mxu0
  %v152 = vadd.f32 %v96, %v151
  %153 = vmatmul.f32.gmra.mxu0 %v27
  %v154 = vpop.f32.mrf.mxu0
  %v155 = vadd.f32 %v96, %v154
  %156 = vmatmul.f32.gmra.mxu0 %v28
  %v157 = vpop.f32.mrf.mxu0
  %v158 = vadd.f32 %v96, %v157
  %159 = vmatmul.f32.gmra.mxu0 %v29
  %v160 = vpop.f32.mrf.mxu0
  %v161 = vadd.f32 %v96, %v160
  %162 = vmatmul.f32.gmra.mxu0 %v30
  %v163 = vpop.f32.mrf.mxu0
  %v164 = vadd.f32 %v96, %v163
  %165 = vmatmul.f32.gmra.mxu0 %v31
  %v166 = vpop.f32.mrf.mxu0
  %v167 = vadd.f32 %v96, %v166
  %168 = vmatmul.f32.gmra.mxu0 %v32
  %v169 = vpop.f32.mrf.mxu0
  %v170 = vadd.f32 %v96, %v169
  %171 = vmatmul.f32.gmra.mxu0 %v33
  %v172 = vpop.f32.mrf.mxu0
  %v173 = vadd.f32 %v96, %v172
  %174 = vmatmul.f32.gmra.mxu0 %v34
  %v175 = vpop.f32.mrf.mxu0
  %v176 = vadd.f32 %v96, %v175
  %177 = vmatmul.f32.gmra.mxu0 %v35
  %v178 = vpop.f32.mrf.mxu0
  %v179 = vadd.f32 %v96, %v178
  %180 = vmatmul.f32.gmra.mxu0 %v36
  %v181 = vpop.f32.mrf.mxu0
  %v182 = vadd.f32 %v96, %v181
  %183 = vmatmul.f32.gmra.mxu0 %v37
  %v184 = vpop.f32.mrf.mxu0
  %v185 = vadd.f32 %v96, %v184
  %186 = vmatmul.f32.gmra.mxu0 %v38
  %v187 = vpop.f32.mrf.mxu0
  %v188 = vadd.f32 %v96, %v187
  %189 = vmatmul.f32.gmra.mxu0 %v39
  %v190 = vpop.f32.mrf.mxu0
  %v191 = vadd.f32 %v96, %v190
  %192 = vmatmul.f32.gmra.mxu0 %v40
  %v193 = vpop.f32.mrf.mxu0
  %v194 = vadd.f32 %v96, %v193
  %195 = vmatmul.f32.gmra.mxu0 %v41
  %v196 = vpop.f32.mrf.mxu0
  %v197 = vadd.f32 %v96, %v196
  %198 = vmatmul.f32.gmra.mxu0 %v42
  %v199 = vpop.f32.mrf.mxu0
  %v200 = vadd.f32 %v96, %v199
  %201 = vmatmul.f32.gmra.mxu0 %v43
  %v202 = vpop.f32.mrf.mxu0
  %v203 = vadd.f32 %v96, %v202
  %204 = vmatmul.f32.gmra.mxu0 %v44
  %v205 = vpop.f32.mrf.mxu0
  %v206 = vadd.f32 %v96, %v205
  %207 = vmatmul.f32.gmra.mxu0 %v45
  %v208 = vpop.f32.mrf.mxu0
  %v209 = vadd.f32 %v96, %v208
  %210 = vmatmul.f32.gmra.mxu0 %v46
  %v211 = vpop.f32.mrf.mxu0
  %v212 = vadd.f32 %v96, %v211
  %213 = vmatmul.f32.gmra.mxu0 %v47
  %v214 = vpop.f32.mrf.mxu0
  %v215 = vadd.f32 %v96, %v214
  %216 = vmatmul.f32.gmra.mxu0 %v48
  %v217 = vpop.f32.mrf.mxu0
  %v218 = vadd.f32 %v96, %v217
  %219 = vmatmul.f32.gmra.mxu0 %v49
  %v220 = vpop.f32.mrf.mxu0
  %v221 = vadd.f32 %v96, %v220
  %222 = vmatmul.f32.gmra.mxu0 %v50
  %v223 = vpop.f32.mrf.mxu0
  %v224 = vadd.f32 %v96, %v223
  %225 = vmatmul.f32.gmra.mxu0 %v51
  %v226 = vpop.f32.mrf.mxu0
  %v227 = vadd.f32 %v96, %v226
  %228 = vmatmul.f32.gmra.mxu0 %v52
  %v229 = vpop.f32.mrf.mxu0
  %v230 = vadd.f32 %v96, %v229
  %231 = vmatmul.f32.gmra.mxu0 %v53
  %v232 = vpop.f32.mrf.mxu0
  %v233 = vadd.f32 %v96, %v232
  %234 = vmatmul.f32.gmra.mxu0 %v54
  %v235 = vpop.f32.mrf.mxu0
  %v236 = vadd.f32 %v96, %v235
  %237 = vmatmul.f32.gmra.mxu0 %v55
  %v238 = vpop.f32.mrf.mxu0
  %v239 = vadd.f32 %v96, %v238
  %240 = vmatmul.f32.gmra.mxu0 %v56
  %v241 = vpop.f32.mrf.mxu0
  %v242 = vadd.f32 %v96, %v241
  %243 = vmatmul.f32.gmra.mxu0 %v57
  %v244 = vpop.f32.mrf.mxu0
  %v245 = vadd.f32 %v96, %v244
  %246 = vmatmul.f32.gmra.mxu0 %v58
  %v247 = vpop.f32.mrf.mxu0
  %v248 = vadd.f32 %v96, %v247
  %249 = vmatmul.f32.gmra.mxu0 %v59
  %v250 = vpop.f32.mrf.mxu0
  %v251 = vadd.f32 %v96, %v250
  %252 = vmatmul.f32.gmra.mxu0 %v60
  %v253 = vpop.f32.mrf.mxu0
  %v254 = vadd.f32 %v96, %v253
  %255 = vmatmul.f32.gmra.mxu0 %v61
  %v256 = vpop.f32.mrf.mxu0
  %v257 = vadd.f32 %v96, %v256
  %258 = vmatmul.f32.gmra.mxu0 %v62
  %v259 = vpop.f32.mrf.mxu0
  %v260 = vadd.f32 %v96, %v259
  %261 = vmatmul.f32.gmra.mxu0 %v63
  %v262 = vpop.f32.mrf.mxu0
  %v263 = vadd.f32 %v96, %v262
  %264 = vmatmul.f32.gmra.mxu0 %v64
  %v265 = vpop.f32.mrf.mxu0
  %v266 = vadd.f32 %v96, %v265
  %267 = vmatmul.f32.gmra.mxu0 %v65
  %v268 = vpop.f32.mrf.mxu0
  %v269 = vadd.f32 %v96, %v268
  %270 = vmatmul.f32.gmra.mxu0 %v66
  %v271 = vpop.f32.mrf.mxu0
  %v272 = vadd.f32 %v96, %v271
  %273 = vmatmul.f32.gmra.mxu0 %v67
  %v274 = vpop.f32.mrf.mxu0
  %v275 = vadd.f32 %v96, %v274
  %276 = vmatmul.f32.gmra.mxu0 %v68
  %v277 = vpop.f32.mrf.mxu0
  %v278 = vadd.f32 %v96, %v277
  %279 = vmatmul.f32.gmra.mxu0 %v69
  %v280 = vpop.f32.mrf.mxu0
  %v281 = vadd.f32 %v96, %v280
  %282 = vmatmul.f32.gmra.mxu0 %v70
  %v283 = vpop.f32.mrf.mxu0
  %v284 = vadd.f32 %v96, %v283
  %285 = vmatmul.f32.gmra.mxu0 %v71
  %v286 = vpop.f32.mrf.mxu0
  %v287 = vadd.f32 %v96, %v286
  %288 = vmatmul.f32.gmra.mxu0 %v72
  %v289 = vpop.f32.mrf.mxu0
  %v290 = vadd.f32 %v96, %v289
  %291 = vmatmul.f32.gmra.mxu0 %v73
  %v292 = vpop.f32.mrf.mxu0
  %v293 = vadd.f32 %v96, %v292
  %294 = vmatmul.f32.gmra.mxu0 %v74
  %v295 = vpop.f32.mrf.mxu0
  %v296 = vadd.f32 %v96, %v295
  %297 = vmatmul.f32.gmra.mxu0 %v75
  %v298 = vpop.f32.mrf.mxu0
  %v299 = vadd.f32 %v96, %v298
  %300 = vmatmul.f32.gmra.mxu0 %v76
  %v301 = vpop.f32.mrf.mxu0
  %v302 = vadd.f32 %v96, %v301
  %303 = vmatmul.f32.gmra.mxu0 %v77
  %v304 = vpop.f32.mrf.mxu0
  %v305 = vadd.f32 %v96, %v304
  %306 = vdwg.mxu0
  %v307 = vmax.f32 %v116, 0.0
  %v308 = vmax.f32 %v119, 0.0
  %v309 = vmax.f32 %v122, 0.0
  %v310 = vmax.f32 %v125, 0.0
  %v311 = vmax.f32 %v128, 0.0
  %v312 = vmax.f32 %v131, 0.0
  %v313 = vmax.f32 %v134, 0.0
  %v314 = vmax.f32 %v137, 0.0
  %v315 = vmax.f32 %v140, 0.0
  %v316 = vmax.f32 %v143, 0.0
  %v317 = vmax.f32 %v146, 0.0
  %v318 = vmax.f32 %v149, 0.0
  %v319 = vmax.f32 %v152, 0.0
  %v320 = vmax.f32 %v155, 0.0
  %v321 = vmax.f32 %v158, 0.0
  %v322 = vmax.f32 %v161, 0.0
  %v323 = vmax.f32 %v164, 0.0
  %v324 = vmax.f32 %v167, 0.0
  %v325 = vmax.f32 %v170, 0.0
  %v326 = vmax.f32 %v173, 0.0
  %v327 = vmax.f32 %v176, 0.0
  %v328 = vmax.f32 %v179, 0.0
  %v329 = vmax.f32 %v182, 0.0
  %v330 = vmax.f32 %v185, 0.0
  %v331 = vmax.f32 %v188, 0.0
  %v332 = vmax.f32 %v191, 0.0
  %v333 = vmax.f32 %v194, 0.0
  %v334 = vmax.f32 %v197, 0.0
  %v335 = vmax.f32 %v200, 0.0
  %v336 = vmax.f32 %v203, 0.0
  %v337 = vmax.f32 %v206, 0.0
  %v338 = vmax.f32 %v209, 0.0
  %v339 = vmax.f32 %v212, 0.0
  %v340 = vmax.f32 %v215, 0.0
  %v341 = vmax.f32 %v218, 0.0
  %v342 = vmax.f32 %v221, 0.0
  %v343 = vmax.f32 %v224, 0.0
  %v344 = vmax.f32 %v227, 0.0
  %v345 = vmax.f32 %v230, 0.0
  %v346 = vmax.f32 %v233, 0.0
  %v347 = vmax.f32 %v236, 0.0
  %v348 = vmax.f32 %v239, 0.0
  %v349 = vmax.f32 %v242, 0.0
  %v350 = vmax.f32 %v245, 0.0
  %v351 = vmax.f32 %v248, 0.0
  %v352 = vmax.f32 %v251, 0.0
  %v353 = vmax.f32 %v254, 0.0
  %v354 = vmax.f32 %v257, 0.0
  %v355 = vmax.f32 %v260, 0.0
  %v356 = vmax.f32 %v263, 0.0
  %v357 = vmax.f32 %v266, 0.0
  %v358 = vmax.f32 %v269, 0.0
  %v359 = vmax.f32 %v272, 0.0
  %v360 = vmax.f32 %v275, 0.0
  %v361 = vmax.f32 %v278, 0.0
  %v362 = vmax.f32 %v281, 0.0
  %v363 = vmax.f32 %v284, 0.0
  %v364 = vmax.f32 %v287, 0.0
  %v365 = vmax.f32 %v290, 0.0
  %v366 = vmax.f32 %v293, 0.0
  %v367 = vmax.f32 %v296, 0.0
  %v368 = vmax.f32 %v299, 0.0
  %v369 = vmax.f32 %v302, 0.0
  %v370 = vmax.f32 %v305, 0.0
  %371 = vst [vmem:[%s3] sm:$0xff] %v307
  %372 = vst [vmem:[%s3 + $0x8] sm:$0xff] %v308
  %373 = vst [vmem:[%s3 + $0x10] sm:$0xff] %v309
  %374 = vst [vmem:[%s3 + $0x18] sm:$0xff] %v310
  %375 = vst [vmem:[%s3 + $0x20] sm:$0xff] %v311
  %376 = vst [vmem:[%s3 + $0x28] sm:$0xff] %v312
  %377 = vst [vmem:[%s3 + $0x30] sm:$0xff] %v313
  %378 = vst [vmem:[%s3 + $0x38] sm:$0xff] %v314
  %379 = vst [vmem:[%s3 + $0x40] sm:$0xff] %v315
  %380 = vst [vmem:[%s3 + $0x48] sm:$0xff] %v316
  %381 = vst [vmem:[%s3 + $0x50] sm:$0xff] %v317
  %382 = vst [vmem:[%s3 + $0x58] sm:$0xff] %v318
  %383 = vst [vmem:[%s3 + $0x60] sm:$0xff] %v319
  %384 = vst [vmem:[%s3 + $0x68] sm:$0xff] %v320
  %385 = vst [vmem:[%s3 + $0x70] sm:$0xff] %v321
  %386 = vst [vmem:[%s3 + $0x78] sm:$0xff] %v322
  %387 = vst [vmem:[%s3 + $0x80] sm:$0xff] %v323
  %388 = vst [vmem:[%s3 + $0x88] sm:$0xff] %v324
  %389 = vst [vmem:[%s3 + $0x90] sm:$0xff] %v325
  %390 = vst [vmem:[%s3 + $0x98] sm:$0xff] %v326
  %391 = vst [vmem:[%s3 + $0xa0] sm:$0xff] %v327
  %392 = vst [vmem:[%s3 + $0xa8] sm:$0xff] %v328
  %393 = vst [vmem:[%s3 + $0xb0] sm:$0xff] %v329
  %394 = vst [vmem:[%s3 + $0xb8] sm:$0xff] %v330
  %395 = vst [vmem:[%s3 + $0xc0] sm:$0xff] %v331
  %396 = vst [vmem:[%s3 + $0xc8] sm:$0xff] %v332
  %397 = vst [vmem:[%s3 + $0xd0] sm:$0xff] %v333
  %398 = vst [vmem:[%s3 + $0xd8] sm:$0xff] %v334
  %399 = vst [vmem:[%s3 + $0xe0] sm:$0xff] %v335
  %400 = vst [vmem:[%s3 + $0xe8] sm:$0xff] %v336
  %401 = vst [vmem:[%s3 + $0xf0] sm:$0xff] %v337
  %402 = vst [vmem:[%s3 + $0xf8] sm:$0xff] %v338
  %403 = vst [vmem:[%s3 + $0x100] sm:$0xff] %v339
  %404 = vst [vmem:[%s3 + $0x108] sm:$0xff] %v340
  %405 = vst [vmem:[%s3 + $0x110] sm:$0xff] %v341
  %406 = vst [vmem:[%s3 + $0x118] sm:$0xff] %v342
  %407 = vst [vmem:[%s3 + $0x120] sm:$0xff] %v343
  %408 = vst [vmem:[%s3 + $0x128] sm:$0xff] %v344
  %409 = vst [vmem:[%s3 + $0x130] sm:$0xff] %v345
  %410 = vst [vmem:[%s3 + $0x138] sm:$0xff] %v346
  %411 = vst [vmem:[%s3 + $0x140] sm:$0xff] %v347
  %412 = vst [vmem:[%s3 + $0x148] sm:$0xff] %v348
  %413 = vst [vmem:[%s3 + $0x150] sm:$0xff] %v349
  %414 = vst [vmem:[%s3 + $0x158] sm:$0xff] %v350
  %415 = vst [vmem:[%s3 + $0x160] sm:$0xff] %v351
  %416 = vst [vmem:[%s3 + $0x168] sm:$0xff] %v352
  %417 = vst [vmem:[%s3 + $0x170] sm:$0xff] %v353
  %418 = vst [vmem:[%s3 + $0x178] sm:$0xff] %v354
  %419 = vst [vmem:[%s3 + $0x180] sm:$0xff] %v355
  %420 = vst [vmem:[%s3 + $0x188] sm:$0xff] %v356
  %421 = vst [vmem:[%s3 + $0x190] sm:$0xff] %v357
  %422 = vst [vmem:[%s3 + $0x198] sm:$0xff] %v358
  %423 = vst [vmem:[%s3 + $0x1a0] sm:$0xff] %v359
  %424 = vst [vmem:[%s3 + $0x1a8] sm:$0xff] %v360
  %425 = vst [vmem:[%s3 + $0x1b0] sm:$0xff] %v361
  %426 = vst [vmem:[%s3 + $0x1b8] sm:$0xff] %v362
  %427 = vst [vmem:[%s3 + $0x1c0] sm:$0xff] %v363
  %428 = vst [vmem:[%s3 + $0x1c8] sm:$0xff] %v364
  %429 = vst [vmem:[%s3 + $0x1d0] sm:$0xff] %v365
  %430 = vst [vmem:[%s3 + $0x1d8] sm:$0xff] %v366
  %431 = vst [vmem:[%s3 + $0x1e0] sm:$0xff] %v367
  %432 = vst [vmem:[%s3 + $0x1e8] sm:$0xff] %v368
  %433 = vst [vmem:[%s3 + $0x1f0] sm:$0xff] %v369
  %434 = vst [vmem:[%s3 + $0x1f8] sm:$0xff] %v370
  // Predicated region
  $region14: #{spectral_transform.4} parent=0 // pred_check
    _
  $region15: #{spectral_transform.4} parent=0 // pred_check_branch
    %436 = sbr.rel (0) target = $region17
  $region16: #{spectral_transform.4} parent=0 // pred_region
    _
  $region17: #{spectral_transform.4} parent=0 // pred_fallthru
    _
  // Predicated region
  $region18: #{spectral_transform.4} parent=0 // pred_check
    _
  $region19: #{spectral_transform.4} parent=0 // pred_check_branch
    %438 = sbr.rel (0) target = $region21
  $region20: #{spectral_transform.4} parent=0 // pred_region
    _
  $region21: #{spectral_transform.4} parent=0 // pred_fallthru
    _

// kernel: spectral_transform.6
$region0: #{spectral_transform.6}
  #allocation0 [shape = 'u32[]', space=smem, size = 0x4, offset = 0x4, fixed_abs, tag = 'smem constant byte address 0x4 - core index']
  #allocation1 [shape = 'u32[72,128]{1,0:T(1,128)}', space=vmem, size = 0x9000, scoped, tag = 'internal scratch']
  %s0 = inlined_call_operand.vmem [shape: f32[8,128], index: 0, kind: input, shape index: {}]
  %s1 = inlined_call_operand.vmem [shape: f32[128,128], index: 1, kind: input, shape index: {}]
  %s2 = inlined_call_operand.vmem [shape: f32[1,128], index: 2, kind: input, shape index: {}]
  %s3 = inlined_call_operand.vmem [shape: f32[8,128], index: 3, kind: output, shape index: {}]
  %s4 = sld [smem:[#allocation0]]
  $region22: #{spectral_transform.6} parent=0
    _
  %s6 = ssub.s32 1, %s4
  %s7 = scalar_select 0, %s6, %s4
  // Predicated region
  $region2: #{spectral_transform.6} parent=0 // pred_check
    _
  $region3: #{spectral_transform.6} parent=0 // pred_check_branch
    %9 = sbr.rel (0) target = $region5
  $region4: #{spectral_transform.6} parent=0 // pred_region
    _
  $region5: #{spectral_transform.6} parent=0 // pred_fallthru
    _
  // Predicated region
  $region6: #{spectral_transform.6} parent=0 // pred_check
    _
  $region7: #{spectral_transform.6} parent=0 // pred_check_branch
    %11 = sbr.rel (0) target = $region9
  $region8: #{spectral_transform.6} parent=0 // pred_region
    _
  $region9: #{spectral_transform.6} parent=0 // pred_fallthru
    _
  // Predicated region
  $region10: #{spectral_transform.6} parent=0 // pred_check
    _
  $region11: #{spectral_transform.6} parent=0 // pred_check_branch
    %13 = sbr.rel (0) target = $region13
  $region12: #{spectral_transform.6} parent=0 // pred_region
    _
  $region13: #{spectral_transform.6} parent=0 // pred_fallthru
    _
  %v14 = vld [vmem:[%s0] sm:$0xff]
  %v15 = vld [vmem:[%s1] sm:$0xff]
  %v16 = vld [vmem:[%s1 + $0x8] sm:$0xff]
  %v17 = vld [vmem:[%s1 + $0x10] sm:$0xff]
  %v18 = vld [vmem:[%s1 + $0x18] sm:$0xff]
  %v19 = vld [vmem:[%s1 + $0x20] sm:$0xff]
  %v20 = vld [vmem:[%s1 + $0x28] sm:$0xff]
  %v21 = vld [vmem:[%s1 + $0x30] sm:$0xff]
  %v22 = vld [vmem:[%s1 + $0x38] sm:$0xff]
  %v23 = vld [vmem:[%s1 + $0x40] sm:$0xff]
  %v24 = vld [vmem:[%s1 + $0x48] sm:$0xff]
  %v25 = vld [vmem:[%s1 + $0x50] sm:$0xff]
  %v26 = vld [vmem:[%s1 + $0x58] sm:$0xff]
  %v27 = vld [vmem:[%s1 + $0x60] sm:$0xff]
  %v28 = vld [vmem:[%s1 + $0x68] sm:$0xff]
  %v29 = vld [vmem:[%s1 + $0x70] sm:$0xff]
  %v30 = vld [vmem:[%s1 + $0x78] sm:$0xff]
  %v31 = vld [vmem:[%s2] sm:$0x1]
  %v33 = vperm.slane %v31, 0
  %35 = vmatpush.msra.mxu0 %v30
  %36 = vmatpush.msra.mxu0 %v29
  %37 = vmatpush.msra.mxu0 %v28
  %38 = vmatpush.msra.mxu0 %v27
  %39 = vmatpush.msra.mxu0 %v26
  %40 = vmatpush.msra.mxu0 %v25
  %41 = vmatpush.msra.mxu0 %v24
  %42 = vmatpush.msra.mxu0 %v23
  %43 = vmatpush.msra.mxu0 %v22
  %44 = vmatpush.msra.mxu0 %v21
  %45 = vmatpush.msra.mxu0 %v20
  %46 = vmatpush.msra.mxu0 %v19
  %47 = vmatpush.msra.mxu0 %v18
  %48 = vmatpush.msra.mxu0 %v17
  %49 = vmatpush.msra.mxu0 %v16
  %50 = vmatpush.msra.mxu0 %v15
  %51 = vmatmul.f32.gmra.mxu0 %v14
  %v52 = vpop.f32.mrf.mxu0
  %v53 = vadd.f32 %v33, %v52
  %54 = vdwg.mxu0
  %v55 = vmax.f32 %v53, 0.0
  %56 = vst [vmem:[%s3] sm:$0xff] %v55
  // Predicated region
  $region14: #{spectral_transform.6} parent=0 // pred_check
    _
  $region15: #{spectral_transform.6} parent=0 // pred_check_branch
    %58 = sbr.rel (0) target = $region17
  $region16: #{spectral_transform.6} parent=0 // pred_region
    _
  $region17: #{spectral_transform.6} parent=0 // pred_fallthru
    _
  // Predicated region
  $region18: #{spectral_transform.6} parent=0 // pred_check
    _
  $region19: #{spectral_transform.6} parent=0 // pred_check_branch
    %60 = sbr.rel (0) target = $region21
  $region20: #{spectral_transform.6} parent=0 // pred_region
    _
  $region21: #{spectral_transform.6} parent=0 // pred_fallthru
    _

// kernel: spectral_transform.5
$region0: #{spectral_transform.5}
  #allocation0 [shape = 'u32[]', space=smem, size = 0x4, offset = 0x4, fixed_abs, tag = 'smem constant byte address 0x4 - core index']
  #allocation1 [shape = 'u32[72,128]{1,0:T(1,128)}', space=vmem, size = 0x9000, scoped, tag = 'internal scratch']
  %s0 = inlined_call_operand.vmem [shape: f32[288,128], index: 0, kind: input, shape index: {}]
  %s1 = inlined_call_operand.vmem [shape: f32[128,128], index: 1, kind: input, shape index: {}]
  %s2 = inlined_call_operand.vmem [shape: f32[1,128], index: 2, kind: input, shape index: {}]
  %s3 = inlined_call_operand.vmem [shape: f32[288,128], index: 3, kind: output, shape index: {}]
  %s4 = sld [smem:[#allocation0]]
  $region22: #{spectral_transform.5} parent=0
    _
  %s6 = ssub.s32 1, %s4
  %s7 = scalar_select 0, %s6, %s4
  // Predicated region
  $region2: #{spectral_transform.5} parent=0 // pred_check
    _
  $region3: #{spectral_transform.5} parent=0 // pred_check_branch
    %9 = sbr.rel (0) target = $region5
  $region4: #{spectral_transform.5} parent=0 // pred_region
    _
  $region5: #{spectral_transform.5} parent=0 // pred_fallthru
    _
  // Predicated region
  $region6: #{spectral_transform.5} parent=0 // pred_check
    _
  $region7: #{spectral_transform.5} parent=0 // pred_check_branch
    %11 = sbr.rel (0) target = $region9
  $region8: #{spectral_transform.5} parent=0 // pred_region
    _
  $region9: #{spectral_transform.5} parent=0 // pred_fallthru
    _
  // Predicated region
  $region10: #{spectral_transform.5} parent=0 // pred_check
    _
  $region11: #{spectral_transform.5} parent=0 // pred_check_branch
    %13 = sbr.rel (0) target = $region13
  $region12: #{spectral_transform.5} parent=0 // pred_region
    _
  $region13: #{spectral_transform.5} parent=0 // pred_fallthru
    _
  %v14 = vld [vmem:[%s0] sm:$0xff]
  %v15 = vld [vmem:[%s0 + $0x8] sm:$0xff]
  %v16 = vld [vmem:[%s0 + $0x10] sm:$0xff]
  %v17 = vld [vmem:[%s0 + $0x18] sm:$0xff]
  %v18 = vld [vmem:[%s0 + $0x20] sm:$0xff]
  %v19 = vld [vmem:[%s0 + $0x28] sm:$0xff]
  %v20 = vld [vmem:[%s0 + $0x30] sm:$0xff]
  %v21 = vld [vmem:[%s0 + $0x38] sm:$0xff]
  %v22 = vld [vmem:[%s0 + $0x40] sm:$0xff]
  %v23 = vld [vmem:[%s0 + $0x48] sm:$0xff]
  %v24 = vld [vmem:[%s0 + $0x50] sm:$0xff]
  %v25 = vld [vmem:[%s0 + $0x58] sm:$0xff]
  %v26 = vld [vmem:[%s0 + $0x60] sm:$0xff]
  %v27 = vld [vmem:[%s0 + $0x68] sm:$0xff]
  %v28 = vld [vmem:[%s0 + $0x70] sm:$0xff]
  %v29 = vld [vmem:[%s0 + $0x78] sm:$0xff]
  %v30 = vld [vmem:[%s0 + $0x80] sm:$0xff]
  %v31 = vld [vmem:[%s0 + $0x88] sm:$0xff]
  %v32 = vld [vmem:[%s0 + $0x90] sm:$0xff]
  %v33 = vld [vmem:[%s0 + $0x98] sm:$0xff]
  %v34 = vld [vmem:[%s0 + $0xa0] sm:$0xff]
  %v35 = vld [vmem:[%s0 + $0xa8] sm:$0xff]
  %v36 = vld [vmem:[%s0 + $0xb0] sm:$0xff]
  %v37 = vld [vmem:[%s0 + $0xb8] sm:$0xff]
  %v38 = vld [vmem:[%s0 + $0xc0] sm:$0xff]
  %v39 = vld [vmem:[%s0 + $0xc8] sm:$0xff]
  %v40 = vld [vmem:[%s0 + $0xd0] sm:$0xff]
  %v41 = vld [vmem:[%s0 + $0xd8] sm:$0xff]
  %v42 = vld [vmem:[%s0 + $0xe0] sm:$0xff]
  %v43 = vld [vmem:[%s0 + $0xe8] sm:$0xff]
  %v44 = vld [vmem:[%s0 + $0xf0] sm:$0xff]
  %v45 = vld [vmem:[%s0 + $0xf8] sm:$0xff]
  %v46 = vld [vmem:[%s0 + $0x100] sm:$0xff]
  %v47 = vld [vmem:[%s0 + $0x108] sm:$0xff]
  %v48 = vld [vmem:[%s0 + $0x110] sm:$0xff]
  %v49 = vld [vmem:[%s0 + $0x118] sm:$0xff]
  %v50 = vld [vmem:[%s1] sm:$0xff]
  %v51 = vld [vmem:[%s1 + $0x8] sm:$0xff]
  %v52 = vld [vmem:[%s1 + $0x10] sm:$0xff]
  %v53 = vld [vmem:[%s1 + $0x18] sm:$0xff]
  %v54 = vld [vmem:[%s1 + $0x20] sm:$0xff]
  %v55 = vld [vmem:[%s1 + $0x28] sm:$0xff]
  %v56 = vld [vmem:[%s1 + $0x30] sm:$0xff]
  %v57 = vld [vmem:[%s1 + $0x38] sm:$0xff]
  %v58 = vld [vmem:[%s1 + $0x40] sm:$0xff]
  %v59 = vld [vmem:[%s1 + $0x48] sm:$0xff]
  %v60 = vld [vmem:[%s1 + $0x50] sm:$0xff]
  %v61 = vld [vmem:[%s1 + $0x58] sm:$0xff]
  %v62 = vld [vmem:[%s1 + $0x60] sm:$0xff]
  %v63 = vld [vmem:[%s1 + $0x68] sm:$0xff]
  %v64 = vld [vmem:[%s1 + $0x70] sm:$0xff]
  %v65 = vld [vmem:[%s1 + $0x78] sm:$0xff]
  %v66 = vld [vmem:[%s2] sm:$0x1]
  %v68 = vperm.slane %v66, 0
  %70 = vmatpush.msra.mxu0 %v65
  %71 = vmatpush.msra.mxu0 %v64
  %72 = vmatpush.msra.mxu0 %v63
  %73 = vmatpush.msra.mxu0 %v62
  %74 = vmatpush.msra.mxu0 %v61
  %75 = vmatpush.msra.mxu0 %v60
  %76 = vmatpush.msra.mxu0 %v59
  %77 = vmatpush.msra.mxu0 %v58
  %78 = vmatpush.msra.mxu0 %v57
  %79 = vmatpush.msra.mxu0 %v56
  %80 = vmatpush.msra.mxu0 %v55
  %81 = vmatpush.msra.mxu0 %v54
  %82 = vmatpush.msra.mxu0 %v53
  %83 = vmatpush.msra.mxu0 %v52
  %84 = vmatpush.msra.mxu0 %v51
  %85 = vmatpush.msra.mxu0 %v50
  %86 = vmatmul.f32.gmra.mxu0 %v14
  %v87 = vpop.f32.mrf.mxu0
  %v88 = vadd.f32 %v68, %v87
  %89 = vmatmul.f32.gmra.mxu0 %v15
  %v90 = vpop.f32.mrf.mxu0
  %v91 = vadd.f32 %v68, %v90
  %92 = vmatmul.f32.gmra.mxu0 %v16
  %v93 = vpop.f32.mrf.mxu0
  %v94 = vadd.f32 %v68, %v93
  %95 = vmatmul.f32.gmra.mxu0 %v17
  %v96 = vpop.f32.mrf.mxu0
  %v97 = vadd.f32 %v68, %v96
  %98 = vmatmul.f32.gmra.mxu0 %v18
  %v99 = vpop.f32.mrf.mxu0
  %v100 = vadd.f32 %v68, %v99
  %101 = vmatmul.f32.gmra.mxu0 %v19
  %v102 = vpop.f32.mrf.mxu0
  %v103 = vadd.f32 %v68, %v102
  %104 = vmatmul.f32.gmra.mxu0 %v20
  %v105 = vpop.f32.mrf.mxu0
  %v106 = vadd.f32 %v68, %v105
  %107 = vmatmul.f32.gmra.mxu0 %v21
  %v108 = vpop.f32.mrf.mxu0
  %v109 = vadd.f32 %v68, %v108
  %110 = vmatmul.f32.gmra.mxu0 %v22
  %v111 = vpop.f32.mrf.mxu0
  %v112 = vadd.f32 %v68, %v111
  %113 = vmatmul.f32.gmra.mxu0 %v23
  %v114 = vpop.f32.mrf.mxu0
  %v115 = vadd.f32 %v68, %v114
  %116 = vmatmul.f32.gmra.mxu0 %v24
  %v117 = vpop.f32.mrf.mxu0
  %v118 = vadd.f32 %v68, %v117
  %119 = vmatmul.f32.gmra.mxu0 %v25
  %v120 = vpop.f32.mrf.mxu0
  %v121 = vadd.f32 %v68, %v120
  %122 = vmatmul.f32.gmra.mxu0 %v26
  %v123 = vpop.f32.mrf.mxu0
  %v124 = vadd.f32 %v68, %v123
  %125 = vmatmul.f32.gmra.mxu0 %v27
  %v126 = vpop.f32.mrf.mxu0
  %v127 = vadd.f32 %v68, %v126
  %128 = vmatmul.f32.gmra.mxu0 %v28
  %v129 = vpop.f32.mrf.mxu0
  %v130 = vadd.f32 %v68, %v129
  %131 = vmatmul.f32.gmra.mxu0 %v29
  %v132 = vpop.f32.mrf.mxu0
  %v133 = vadd.f32 %v68, %v132
  %134 = vmatmul.f32.gmra.mxu0 %v30
  %v135 = vpop.f32.mrf.mxu0
  %v136 = vadd.f32 %v68, %v135
  %137 = vmatmul.f32.gmra.mxu0 %v31
  %v138 = vpop.f32.mrf.mxu0
  %v139 = vadd.f32 %v68, %v138
  %140 = vmatmul.f32.gmra.mxu0 %v32
  %v141 = vpop.f32.mrf.mxu0
  %v142 = vadd.f32 %v68, %v141
  %143 = vmatmul.f32.gmra.mxu0 %v33
  %v144 = vpop.f32.mrf.mxu0
  %v145 = vadd.f32 %v68, %v144
  %146 = vmatmul.f32.gmra.mxu0 %v34
  %v147 = vpop.f32.mrf.mxu0
  %v148 = vadd.f32 %v68, %v147
  %149 = vmatmul.f32.gmra.mxu0 %v35
  %v150 = vpop.f32.mrf.mxu0
  %v151 = vadd.f32 %v68, %v150
  %152 = vmatmul.f32.gmra.mxu0 %v36
  %v153 = vpop.f32.mrf.mxu0
  %v154 = vadd.f32 %v68, %v153
  %155 = vmatmul.f32.gmra.mxu0 %v37
  %v156 = vpop.f32.mrf.mxu0
  %v157 = vadd.f32 %v68, %v156
  %158 = vmatmul.f32.gmra.mxu0 %v38
  %v159 = vpop.f32.mrf.mxu0
  %v160 = vadd.f32 %v68, %v159
  %161 = vmatmul.f32.gmra.mxu0 %v39
  %v162 = vpop.f32.mrf.mxu0
  %v163 = vadd.f32 %v68, %v162
  %164 = vmatmul.f32.gmra.mxu0 %v40
  %v165 = vpop.f32.mrf.mxu0
  %v166 = vadd.f32 %v68, %v165
  %167 = vmatmul.f32.gmra.mxu0 %v41
  %v168 = vpop.f32.mrf.mxu0
  %v169 = vadd.f32 %v68, %v168
  %170 = vmatmul.f32.gmra.mxu0 %v42
  %v171 = vpop.f32.mrf.mxu0
  %v172 = vadd.f32 %v68, %v171
  %173 = vmatmul.f32.gmra.mxu0 %v43
  %v174 = vpop.f32.mrf.mxu0
  %v175 = vadd.f32 %v68, %v174
  %176 = vmatmul.f32.gmra.mxu0 %v44
  %v177 = vpop.f32.mrf.mxu0
  %v178 = vadd.f32 %v68, %v177
  %179 = vmatmul.f32.gmra.mxu0 %v45
  %v180 = vpop.f32.mrf.mxu0
  %v181 = vadd.f32 %v68, %v180
  %182 = vmatmul.f32.gmra.mxu0 %v46
  %v183 = vpop.f32.mrf.mxu0
  %v184 = vadd.f32 %v68, %v183
  %185 = vmatmul.f32.gmra.mxu0 %v47
  %v186 = vpop.f32.mrf.mxu0
  %v187 = vadd.f32 %v68, %v186
  %188 = vmatmul.f32.gmra.mxu0 %v48
  %v189 = vpop.f32.mrf.mxu0
  %v190 = vadd.f32 %v68, %v189
  %191 = vmatmul.f32.gmra.mxu0 %v49
  %v192 = vpop.f32.mrf.mxu0
  %v193 = vadd.f32 %v68, %v192
  %194 = vdwg.mxu0
  %v195 = vmax.f32 %v88, 0.0
  %v196 = vmax.f32 %v91, 0.0
  %v197 = vmax.f32 %v94, 0.0
  %v198 = vmax.f32 %v97, 0.0
  %v199 = vmax.f32 %v100, 0.0
  %v200 = vmax.f32 %v103, 0.0
  %v201 = vmax.f32 %v106, 0.0
  %v202 = vmax.f32 %v109, 0.0
  %v203 = vmax.f32 %v112, 0.0
  %v204 = vmax.f32 %v115, 0.0
  %v205 = vmax.f32 %v118, 0.0
  %v206 = vmax.f32 %v121, 0.0
  %v207 = vmax.f32 %v124, 0.0
  %v208 = vmax.f32 %v127, 0.0
  %v209 = vmax.f32 %v130, 0.0
  %v210 = vmax.f32 %v133, 0.0
  %v211 = vmax.f32 %v136, 0.0
  %v212 = vmax.f32 %v139, 0.0
  %v213 = vmax.f32 %v142, 0.0
  %v214 = vmax.f32 %v145, 0.0
  %v215 = vmax.f32 %v148, 0.0
  %v216 = vmax.f32 %v151, 0.0
  %v217 = vmax.f32 %v154, 0.0
  %v218 = vmax.f32 %v157, 0.0
  %v219 = vmax.f32 %v160, 0.0
  %v220 = vmax.f32 %v163, 0.0
  %v221 = vmax.f32 %v166, 0.0
  %v222 = vmax.f32 %v169, 0.0
  %v223 = vmax.f32 %v172, 0.0
  %v224 = vmax.f32 %v175, 0.0
  %v225 = vmax.f32 %v178, 0.0
  %v226 = vmax.f32 %v181, 0.0
  %v227 = vmax.f32 %v184, 0.0
  %v228 = vmax.f32 %v187, 0.0
  %v229 = vmax.f32 %v190, 0.0
  %v230 = vmax.f32 %v193, 0.0
  %231 = vst [vmem:[%s3] sm:$0xff] %v195
  %232 = vst [vmem:[%s3 + $0x8] sm:$0xff] %v196
  %233 = vst [vmem:[%s3 + $0x10] sm:$0xff] %v197
  %234 = vst [vmem:[%s3 + $0x18] sm:$0xff] %v198
  %235 = vst [vmem:[%s3 + $0x20] sm:$0xff] %v199
  %236 = vst [vmem:[%s3 + $0x28] sm:$0xff] %v200
  %237 = vst [vmem:[%s3 + $0x30] sm:$0xff] %v201
  %238 = vst [vmem:[%s3 + $0x38] sm:$0xff] %v202
  %239 = vst [vmem:[%s3 + $0x40] sm:$0xff] %v203
  %240 = vst [vmem:[%s3 + $0x48] sm:$0xff] %v204
  %241 = vst [vmem:[%s3 + $0x50] sm:$0xff] %v205
  %242 = vst [vmem:[%s3 + $0x58] sm:$0xff] %v206
  %243 = vst [vmem:[%s3 + $0x60] sm:$0xff] %v207
  %244 = vst [vmem:[%s3 + $0x68] sm:$0xff] %v208
  %245 = vst [vmem:[%s3 + $0x70] sm:$0xff] %v209
  %246 = vst [vmem:[%s3 + $0x78] sm:$0xff] %v210
  %247 = vst [vmem:[%s3 + $0x80] sm:$0xff] %v211
  %248 = vst [vmem:[%s3 + $0x88] sm:$0xff] %v212
  %249 = vst [vmem:[%s3 + $0x90] sm:$0xff] %v213
  %250 = vst [vmem:[%s3 + $0x98] sm:$0xff] %v214
  %251 = vst [vmem:[%s3 + $0xa0] sm:$0xff] %v215
  %252 = vst [vmem:[%s3 + $0xa8] sm:$0xff] %v216
  %253 = vst [vmem:[%s3 + $0xb0] sm:$0xff] %v217
  %254 = vst [vmem:[%s3 + $0xb8] sm:$0xff] %v218
  %255 = vst [vmem:[%s3 + $0xc0] sm:$0xff] %v219
  %256 = vst [vmem:[%s3 + $0xc8] sm:$0xff] %v220
  %257 = vst [vmem:[%s3 + $0xd0] sm:$0xff] %v221
  %258 = vst [vmem:[%s3 + $0xd8] sm:$0xff] %v222
  %259 = vst [vmem:[%s3 + $0xe0] sm:$0xff] %v223
  %260 = vst [vmem:[%s3 + $0xe8] sm:$0xff] %v224
  %261 = vst [vmem:[%s3 + $0xf0] sm:$0xff] %v225
  %262 = vst [vmem:[%s3 + $0xf8] sm:$0xff] %v226
  %263 = vst [vmem:[%s3 + $0x100] sm:$0xff] %v227
  %264 = vst [vmem:[%s3 + $0x108] sm:$0xff] %v228
  %265 = vst [vmem:[%s3 + $0x110] sm:$0xff] %v229
  %266 = vst [vmem:[%s3 + $0x118] sm:$0xff] %v230
  // Predicated region
  $region14: #{spectral_transform.5} parent=0 // pred_check
    _
  $region15: #{spectral_transform.5} parent=0 // pred_check_branch
    %268 = sbr.rel (0) target = $region17
  $region16: #{spectral_transform.5} parent=0 // pred_region
    _
  $region17: #{spectral_transform.5} parent=0 // pred_fallthru
    _
  // Predicated region
  $region18: #{spectral_transform.5} parent=0 // pred_check
    _
  $region19: #{spectral_transform.5} parent=0 // pred_check_branch
    %270 = sbr.rel (0) target = $region21
  $region20: #{spectral_transform.5} parent=0 // pred_region
    _
  $region21: #{spectral_transform.5} parent=0 // pred_fallthru
    _

// kernel: reverse.1
$region0: #{reverse.1}
  %s0 = inlined_call_operand.vmem [shape: f32[2,4,16,7], index: 0, kind: input, shape index: {}]
  %s1 = inlined_call_operand.vmem [shape: f32[2,4,16,7], index: 1, kind: output, shape index: {}]
  $region1: #{reverse.1} parent=0
    #allocation0 [shape = 'u8[65536]{0}', space=vmem, size = 0x10000, scoped, tag = 'operand span for operand 0']
    #allocation1 [shape = 'u8[32768]{0}', space=vmem, size = 0x8000, scoped, tag = 'operand span for operand 1']
    %s2 = scalar_lea.vmem [#allocation0], 8
    // Predicated region
    $region2: #{reverse.1} parent=1 // pred_check
      _
    $region3: #{reverse.1} parent=1 // pred_check_branch
      %4 = sbr.rel (0) target = $region5
    $region4: #{reverse.1} parent=1 // pred_region
      // Predicated region
      $region6: #{reverse.1} parent=4 // pred_check
        _
      $region7: #{reverse.1} parent=4 // pred_check_branch
        %6 = sbr.rel (0) target = $region9
      $region8: #{reverse.1} parent=4 // pred_region
        // Predicated region
        $region21: #{reverse.1} parent=8 // pred_check
          _
        $region22: #{reverse.1} parent=8 // pred_check_branch
          %36 = sbr.rel (0) target = $region24
        $region23: #{reverse.1} parent=8 // pred_region
          loop: start=0, step=1, limit=1
          $region25: #{reverse.1} parent=23 // loop_pre_header
            _
          $region26: #{reverse.1} parent=23 // loop_header
            %s38 = sphi 0, %s42
            %p39 = scmp.ge.s32.totalorder %s38, 1
            %s43 = sphi %s0, %s0
            %s44 = sphi %s2, %s2
          $region27: #{reverse.1} parent=23 // loop_header_branch
            %41 = sbr.rel (%p39) target = $region31
          $region28: #{reverse.1} parent=23 // loop_body
            %v45 = vld [vmem:[%s43] sm:$0xff]
            %46 = vst [vmem:[%s44] sm:$0xff] %v45
            %v47 = vld [vmem:[%s43 + $0x8] sm:$0xff]
            %48 = vst [vmem:[%s44 + $0x10] sm:$0xff] %v47
            %v49 = vld [vmem:[%s43 + $0x10] sm:$0xff]
            %50 = vst [vmem:[%s44 + $0x20] sm:$0xff] %v49
            %v51 = vld [vmem:[%s43 + $0x18] sm:$0xff]
            %52 = vst [vmem:[%s44 + $0x30] sm:$0xff] %v51
            %v53 = vld [vmem:[%s43 + $0x20] sm:$0xff]
            %54 = vst [vmem:[%s44 + $0x40] sm:$0xff] %v53
            %v55 = vld [vmem:[%s43 + $0x28] sm:$0xff]
            %56 = vst [vmem:[%s44 + $0x50] sm:$0xff] %v55
            %v57 = vld [vmem:[%s43 + $0x30] sm:$0xff]
            %58 = vst [vmem:[%s44 + $0x60] sm:$0xff] %v57
            %v59 = vld [vmem:[%s43 + $0x38] sm:$0xff]
            %60 = vst [vmem:[%s44 + $0x70] sm:$0xff] %v59
          $region29: #{reverse.1} parent=23 // loop_footer
            %s42 = sadd.s32 1, %s38
          $region30: #{reverse.1} parent=23 // loop_footer_branch
            %37 = sbr.rel target = $region26
          $region31: #{reverse.1} parent=23 // loop_exit
            _
        $region24: #{reverse.1} parent=8 // pred_fallthru
          _
        // Predicated region
        $region32: #{reverse.1} parent=8 // pred_check
          _
        $region33: #{reverse.1} parent=8 // pred_check_branch
          %62 = sbr.rel target = $region35
        $region34: #{reverse.1} parent=8 // pred_region
          _
        $region35: #{reverse.1} parent=8 // pred_fallthru
          _
      $region9: #{reverse.1} parent=4 // pred_fallthru
        _
      // Predicated region
      $region10: #{reverse.1} parent=4 // pred_check
        _
      $region11: #{reverse.1} parent=4 // pred_check_branch
        %8 = sbr.rel target = $region13
      $region12: #{reverse.1} parent=4 // pred_region
        %s10 = ssub.s32 256, 1
        loop: start=0, step=1, limit=1
        $region14: #{reverse.1} parent=12 // loop_pre_header
          _
        $region15: #{reverse.1} parent=12 // loop_header
          %s12 = sphi 0, %s16
          %p13 = scmp.ge.s32.totalorder %s12, 1
          %s17 = sphi %s0, %s0
          %s18 = sphi %s2, %s2
        $region16: #{reverse.1} parent=12 // loop_header_branch
          %15 = sbr.rel (%p13) target = $region20
        $region17: #{reverse.1} parent=12 // loop_body
          %v19 = vld [vmem:[%s17] sm:%s10]
          %20 = vst [vmem:[%s18] sm:%s10] %v19
          %v21 = vld [vmem:[%s17 + $0x8] sm:%s10]
          %22 = vst [vmem:[%s18 + $0x10] sm:%s10] %v21
          %v23 = vld [vmem:[%s17 + $0x10] sm:%s10]
          %24 = vst [vmem:[%s18 + $0x20] sm:%s10] %v23
          %v25 = vld [vmem:[%s17 + $0x18] sm:%s10]
          %26 = vst [vmem:[%s18 + $0x30] sm:%s10] %v25
          %v27 = vld [vmem:[%s17 + $0x20] sm:%s10]
          %28 = vst [vmem:[%s18 + $0x40] sm:%s10] %v27
          %v29 = vld [vmem:[%s17 + $0x28] sm:%s10]
          %30 = vst [vmem:[%s18 + $0x50] sm:%s10] %v29
          %v31 = vld [vmem:[%s17 + $0x30] sm:%s10]
          %32 = vst [vmem:[%s18 + $0x60] sm:%s10] %v31
          %v33 = vld [vmem:[%s17 + $0x38] sm:%s10]
          %34 = vst [vmem:[%s18 + $0x70] sm:%s10] %v33
        $region18: #{reverse.1} parent=12 // loop_footer
          %s16 = sadd.s32 1, %s12
        $region19: #{reverse.1} parent=12 // loop_footer_branch
          %11 = sbr.rel target = $region15
        $region20: #{reverse.1} parent=12 // loop_exit
          _
      $region13: #{reverse.1} parent=4 // pred_fallthru
        _
    $region5: #{reverse.1} parent=1 // pred_fallthru
      _
    %63 = vnop
    %s64 = scalar_lea.vmem [#allocation0], 7
    %v65 = vld [vmem:[%s64] ss:$-1 sm:$0xff]
    %v66 = vrot.slane %v65, 1
    %67 = vst [vmem:[#allocation1] sm:$0xff] %v66
    %s68 = scalar_lea.vmem [#allocation0], 8
    %s69 = scalar_lea.vmem %s68, 7 [#allocation0]
    %v70 = vld [vmem:[%s69] ss:$-1 sm:$0xff]
    %v71 = vrot.slane %v70, 1
    %v72 = vlaneseq
    %v73 = vshrl.u32 %v72, 7
    %vm74 = vcmp.lt.s32.totalorder %v73, 7
    %75 = vst.msk [vmem:[#allocation1] sm:$0xff] %vm74, %v71
    %s76 = scalar_lea.vmem [#allocation1], 8
    %s77 = scalar_lea.vmem [#allocation0], 16
    %s78 = scalar_lea.vmem %s77, 7 [#allocation0]
    %v79 = vld [vmem:[%s78] ss:$-1 sm:$0xff]
    %v80 = vrot.slane %v79, 1
    %81 = vst [vmem:[%s76] sm:$0xff] %v80
    %s82 = scalar_lea.vmem %s77, 8 [#allocation0]
    %s83 = scalar_lea.vmem %s82, 7 [#allocation0]
    %v84 = vld [vmem:[%s83] ss:$-1 sm:$0xff]
    %v85 = vrot.slane %v84, 1
    %v86 = vlaneseq
    %v87 = vshrl.u32 %v86, 7
    %vm88 = vcmp.lt.s32.totalorder %v87, 7
    %89 = vst.msk [vmem:[%s76] sm:$0xff] %vm88, %v85
    %s90 = scalar_lea.vmem [#allocation1], 16
    %s91 = scalar_lea.vmem [#allocation0], 32
    %s92 = scalar_lea.vmem %s91, 7 [#allocation0]
    %v93 = vld [vmem:[%s92] ss:$-1 sm:$0xff]
    %v94 = vrot.slane %v93, 1
    %95 = vst [vmem:[%s90] sm:$0xff] %v94
    %s96 = scalar_lea.vmem %s91, 8 [#allocation0]
    %s97 = scalar_lea.vmem %s96, 7 [#allocation0]
    %v98 = vld [vmem:[%s97] ss:$-1 sm:$0xff]
    %v99 = vrot.slane %v98, 1
    %v100 = vlaneseq
    %v101 = vshrl.u32 %v100, 7
    %vm102 = vcmp.lt.s32.totalorder %v101, 7
    %103 = vst.msk [vmem:[%s90] sm:$0xff] %vm102, %v99
    %s104 = scalar_lea.vmem [#allocation1], 24
    %s105 = scalar_lea.vmem [#allocation0], 48
    %s106 = scalar_lea.vmem %s105, 7 [#allocation0]
    %v107 = vld [vmem:[%s106] ss:$-1 sm:$0xff]
    %v108 = vrot.slane %v107, 1
    %109 = vst [vmem:[%s104] sm:$0xff] %v108
    %s110 = scalar_lea.vmem %s105, 8 [#allocation0]
    %s111 = scalar_lea.vmem %s110, 7 [#allocation0]
    %v112 = vld [vmem:[%s111] ss:$-1 sm:$0xff]
    %v113 = vrot.slane %v112, 1
    %v114 = vlaneseq
    %v115 = vshrl.u32 %v114, 7
    %vm116 = vcmp.lt.s32.totalorder %v115, 7
    %117 = vst.msk [vmem:[%s104] sm:$0xff] %vm116, %v113
    %s118 = scalar_lea.vmem [#allocation1], 32
    %s119 = scalar_lea.vmem [#allocation0], 64
    %s120 = scalar_lea.vmem %s119, 7 [#allocation0]
    %v121 = vld [vmem:[%s120] ss:$-1 sm:$0xff]
    %v122 = vrot.slane %v121, 1
    %123 = vst [vmem:[%s118] sm:$0xff] %v122
    %s124 = scalar_lea.vmem %s119, 8 [#allocation0]
    %s125 = scalar_lea.vmem %s124, 7 [#allocation0]
    %v126 = vld [vmem:[%s125] ss:$-1 sm:$0xff]
    %v127 = vrot.slane %v126, 1
    %v128 = vlaneseq
    %v129 = vshrl.u32 %v128, 7
    %vm130 = vcmp.lt.s32.totalorder %v129, 7
    %131 = vst.msk [vmem:[%s118] sm:$0xff] %vm130, %v127
    %s132 = scalar_lea.vmem [#allocation1], 40
    %s133 = scalar_lea.vmem [#allocation0], 80
    %s134 = scalar_lea.vmem %s133, 7 [#allocation0]
    %v135 = vld [vmem:[%s134] ss:$-1 sm:$0xff]
    %v136 = vrot.slane %v135, 1
    %137 = vst [vmem:[%s132] sm:$0xff] %v136
    %s138 = scalar_lea.vmem %s133, 8 [#allocation0]
    %s139 = scalar_lea.vmem %s138, 7 [#allocation0]
    %v140 = vld [vmem:[%s139] ss:$-1 sm:$0xff]
    %v141 = vrot.slane %v140, 1
    %v142 = vlaneseq
    %v143 = vshrl.u32 %v142, 7
    %vm144 = vcmp.lt.s32.totalorder %v143, 7
    %145 = vst.msk [vmem:[%s132] sm:$0xff] %vm144, %v141
    %s146 = scalar_lea.vmem [#allocation1], 48
    %s147 = scalar_lea.vmem [#allocation0], 96
    %s148 = scalar_lea.vmem %s147, 7 [#allocation0]
    %v149 = vld [vmem:[%s148] ss:$-1 sm:$0xff]
    %v150 = vrot.slane %v149, 1
    %151 = vst [vmem:[%s146] sm:$0xff] %v150
    %s152 = scalar_lea.vmem %s147, 8 [#allocation0]
    %s153 = scalar_lea.vmem %s152, 7 [#allocation0]
    %v154 = vld [vmem:[%s153] ss:$-1 sm:$0xff]
    %v155 = vrot.slane %v154, 1
    %v156 = vlaneseq
    %v157 = vshrl.u32 %v156, 7
    %vm158 = vcmp.lt.s32.totalorder %v157, 7
    %159 = vst.msk [vmem:[%s146] sm:$0xff] %vm158, %v155
    %s160 = scalar_lea.vmem [#allocation1], 56
    %s161 = scalar_lea.vmem [#allocation0], 112
    %s162 = scalar_lea.vmem %s161, 7 [#allocation0]
    %v163 = vld [vmem:[%s162] ss:$-1 sm:$0xff]
    %v164 = vrot.slane %v163, 1
    %165 = vst [vmem:[%s160] sm:$0xff] %v164
    %s166 = scalar_lea.vmem %s161, 8 [#allocation0]
    %s167 = scalar_lea.vmem %s166, 7 [#allocation0]
    %v168 = vld [vmem:[%s167] ss:$-1 sm:$0xff]
    %v169 = vrot.slane %v168, 1
    %v170 = vlaneseq
    %v171 = vshrl.u32 %v170, 7
    %vm172 = vcmp.lt.s32.totalorder %v171, 7
    %173 = vst.msk [vmem:[%s160] sm:$0xff] %vm172, %v169
    // Predicated region
    $region36: #{reverse.1} parent=1 // pred_check
      _
    $region37: #{reverse.1} parent=1 // pred_check_branch
      %175 = sbr.rel (0) target = $region39
    $region38: #{reverse.1} parent=1 // pred_region
      // Predicated region
      $region40: #{reverse.1} parent=38 // pred_check
        _
      $region41: #{reverse.1} parent=38 // pred_check_branch
        %177 = sbr.rel (0) target = $region43
      $region42: #{reverse.1} parent=38 // pred_region
        // Predicated region
        $region55: #{reverse.1} parent=42 // pred_check
          _
        $region56: #{reverse.1} parent=42 // pred_check_branch
          %207 = sbr.rel (0) target = $region58
        $region57: #{reverse.1} parent=42 // pred_region
          loop: start=0, step=1, limit=1
          $region59: #{reverse.1} parent=57 // loop_pre_header
            _
          $region60: #{reverse.1} parent=57 // loop_header
            %s209 = sphi 0, %s213
            %p210 = scmp.ge.s32.totalorder %s209, 1
            %s214 = sphi [#allocation1], [#allocation1]
            %s215 = sphi %s1, %s1
          $region61: #{reverse.1} parent=57 // loop_header_branch
            %212 = sbr.rel (%p210) target = $region65
          $region62: #{reverse.1} parent=57 // loop_body
            %v216 = vld [vmem:[%s214] sm:$0xff]
            %217 = vst [vmem:[%s215] sm:$0xff] %v216
            %v218 = vld [vmem:[%s214 + $0x8] sm:$0xff]
            %219 = vst [vmem:[%s215 + $0x8] sm:$0xff] %v218
            %v220 = vld [vmem:[%s214 + $0x10] sm:$0xff]
            %221 = vst [vmem:[%s215 + $0x10] sm:$0xff] %v220
            %v222 = vld [vmem:[%s214 + $0x18] sm:$0xff]
            %223 = vst [vmem:[%s215 + $0x18] sm:$0xff] %v222
            %v224 = vld [vmem:[%s214 + $0x20] sm:$0xff]
            %225 = vst [vmem:[%s215 + $0x20] sm:$0xff] %v224
            %v226 = vld [vmem:[%s214 + $0x28] sm:$0xff]
            %227 = vst [vmem:[%s215 + $0x28] sm:$0xff] %v226
            %v228 = vld [vmem:[%s214 + $0x30] sm:$0xff]
            %229 = vst [vmem:[%s215 + $0x30] sm:$0xff] %v228
            %v230 = vld [vmem:[%s214 + $0x38] sm:$0xff]
            %231 = vst [vmem:[%s215 + $0x38] sm:$0xff] %v230
          $region63: #{reverse.1} parent=57 // loop_footer
            %s213 = sadd.s32 1, %s209
          $region64: #{reverse.1} parent=57 // loop_footer_branch
            %208 = sbr.rel target = $region60
          $region65: #{reverse.1} parent=57 // loop_exit
            _
        $region58: #{reverse.1} parent=42 // pred_fallthru
          _
        // Predicated region
        $region66: #{reverse.1} parent=42 // pred_check
          _
        $region67: #{reverse.1} parent=42 // pred_check_branch
          %233 = sbr.rel target = $region69
        $region68: #{reverse.1} parent=42 // pred_region
          _
        $region69: #{reverse.1} parent=42 // pred_fallthru
          _
      $region43: #{reverse.1} parent=38 // pred_fallthru
        _
      // Predicated region
      $region44: #{reverse.1} parent=38 // pred_check
        _
      $region45: #{reverse.1} parent=38 // pred_check_branch
        %179 = sbr.rel target = $region47
      $region46: #{reverse.1} parent=38 // pred_region
        %s181 = ssub.s32 256, 1
        loop: start=0, step=1, limit=1
        $region48: #{reverse.1} parent=46 // loop_pre_header
          _
        $region49: #{reverse.1} parent=46 // loop_header
          %s183 = sphi 0, %s187
          %p184 = scmp.ge.s32.totalorder %s183, 1
          %s188 = sphi [#allocation1], [#allocation1]
          %s189 = sphi %s1, %s1
        $region50: #{reverse.1} parent=46 // loop_header_branch
          %186 = sbr.rel (%p184) target = $region54
        $region51: #{reverse.1} parent=46 // loop_body
          %v190 = vld [vmem:[%s188] sm:%s181]
          %191 = vst [vmem:[%s189] sm:%s181] %v190
          %v192 = vld [vmem:[%s188 + $0x8] sm:%s181]
          %193 = vst [vmem:[%s189 + $0x8] sm:%s181] %v192
          %v194 = vld [vmem:[%s188 + $0x10] sm:%s181]
          %195 = vst [vmem:[%s189 + $0x10] sm:%s181] %v194
          %v196 = vld [vmem:[%s188 + $0x18] sm:%s181]
          %197 = vst [vmem:[%s189 + $0x18] sm:%s181] %v196
          %v198 = vld [vmem:[%s188 + $0x20] sm:%s181]
          %199 = vst [vmem:[%s189 + $0x20] sm:%s181] %v198
          %v200 = vld [vmem:[%s188 + $0x28] sm:%s181]
          %201 = vst [vmem:[%s189 + $0x28] sm:%s181] %v200
          %v202 = vld [vmem:[%s188 + $0x30] sm:%s181]
          %203 = vst [vmem:[%s189 + $0x30] sm:%s181] %v202
          %v204 = vld [vmem:[%s188 + $0x38] sm:%s181]
          %205 = vst [vmem:[%s189 + $0x38] sm:%s181] %v204
        $region52: #{reverse.1} parent=46 // loop_footer
          %s187 = sadd.s32 1, %s183
        $region53: #{reverse.1} parent=46 // loop_footer_branch
          %182 = sbr.rel target = $region49
        $region54: #{reverse.1} parent=46 // loop_exit
          _
      $region47: #{reverse.1} parent=38 // pred_fallthru
        _
    $region39: #{reverse.1} parent=1 // pred_fallthru
      _
    %234 = vnop

// kernel: spectral_transform.7
$region0: #{spectral_transform.7}
  #allocation0 [shape = 'u32[]', space=smem, size = 0x4, offset = 0x4, fixed_abs, tag = 'smem constant byte address 0x4 - core index']
  #allocation1 [shape = 'u32[72,128]{1,0:T(1,128)}', space=vmem, size = 0x9000, scoped, tag = 'internal scratch']
  %s0 = inlined_call_operand.vmem [shape: f32[512,128], index: 0, kind: input, shape index: {}]
  %s1 = inlined_call_operand.vmem [shape: f32[512,128], index: 1, kind: input, shape index: {}]
  %s2 = inlined_call_operand.vmem [shape: f32[512,128], index: 2, kind: input, shape index: {}]
  %s3 = inlined_call_operand.vmem [shape: f32[128,128], index: 3, kind: input, shape index: {}]
  %s4 = inlined_call_operand.vmem [shape: f32[512,128], index: 4, kind: output, shape index: {}]
  %s5 = sld [smem:[#allocation0]]
  $region26: #{spectral_transform.7} parent=0
    _
  %s7 = ssub.s32 1, %s5
  %s8 = scalar_select 0, %s7, %s5
  // Predicated region
  $region2: #{spectral_transform.7} parent=0 // pred_check
    _
  $region3: #{spectral_transform.7} parent=0 // pred_check_branch
    %10 = sbr.rel (0) target = $region5
  $region4: #{spectral_transform.7} parent=0 // pred_region
    _
  $region5: #{spectral_transform.7} parent=0 // pred_fallthru
    _
  // Predicated region
  $region6: #{spectral_transform.7} parent=0 // pred_check
    _
  $region7: #{spectral_transform.7} parent=0 // pred_check_branch
    %12 = sbr.rel (0) target = $region9
  $region8: #{spectral_transform.7} parent=0 // pred_region
    _
  $region9: #{spectral_transform.7} parent=0 // pred_fallthru
    _
  // Predicated region
  $region10: #{spectral_transform.7} parent=0 // pred_check
    _
  $region11: #{spectral_transform.7} parent=0 // pred_check_branch
    %14 = sbr.rel (0) target = $region13
  $region12: #{spectral_transform.7} parent=0 // pred_region
    _
  $region13: #{spectral_transform.7} parent=0 // pred_fallthru
    _
  // Predicated region
  $region14: #{spectral_transform.7} parent=0 // pred_check
    _
  $region15: #{spectral_transform.7} parent=0 // pred_check_branch
    %16 = sbr.rel (0) target = $region17
  $region16: #{spectral_transform.7} parent=0 // pred_region
    _
  $region17: #{spectral_transform.7} parent=0 // pred_fallthru
    _
  %v17 = vld [vmem:[%s0] sm:$0xff]
  %v18 = vld [vmem:[%s0 + $0x8] sm:$0xff]
  %v19 = vld [vmem:[%s0 + $0x10] sm:$0xff]
  %v20 = vld [vmem:[%s0 + $0x18] sm:$0xff]
  %v21 = vld [vmem:[%s0 + $0x20] sm:$0xff]
  %v22 = vld [vmem:[%s0 + $0x28] sm:$0xff]
  %v23 = vld [vmem:[%s0 + $0x30] sm:$0xff]
  %v24 = vld [vmem:[%s0 + $0x38] sm:$0xff]
  %v25 = vld [vmem:[%s0 + $0x40] sm:$0xff]
  %v26 = vld [vmem:[%s0 + $0x48] sm:$0xff]
  %v27 = vld [vmem:[%s0 + $0x50] sm:$0xff]
  %v28 = vld [vmem:[%s0 + $0x58] sm:$0xff]
  %v29 = vld [vmem:[%s0 + $0x60] sm:$0xff]
  %v30 = vld [vmem:[%s0 + $0x68] sm:$0xff]
  %v31 = vld [vmem:[%s0 + $0x70] sm:$0xff]
  %v32 = vld [vmem:[%s0 + $0x78] sm:$0xff]
  %v33 = vld [vmem:[%s0 + $0x80] sm:$0xff]
  %v34 = vld [vmem:[%s0 + $0x88] sm:$0xff]
  %v35 = vld [vmem:[%s0 + $0x90] sm:$0xff]
  %v36 = vld [vmem:[%s0 + $0x98] sm:$0xff]
  %v37 = vld [vmem:[%s0 + $0xa0] sm:$0xff]
  %v38 = vld [vmem:[%s0 + $0xa8] sm:$0xff]
  %v39 = vld [vmem:[%s0 + $0xb0] sm:$0xff]
  %v40 = vld [vmem:[%s0 + $0xb8] sm:$0xff]
  %v41 = vld [vmem:[%s0 + $0xc0] sm:$0xff]
  %v42 = vld [vmem:[%s0 + $0xc8] sm:$0xff]
  %v43 = vld [vmem:[%s0 + $0xd0] sm:$0xff]
  %v44 = vld [vmem:[%s0 + $0xd8] sm:$0xff]
  %v45 = vld [vmem:[%s0 + $0xe0] sm:$0xff]
  %v46 = vld [vmem:[%s0 + $0xe8] sm:$0xff]
  %v47 = vld [vmem:[%s0 + $0xf0] sm:$0xff]
  %v48 = vld [vmem:[%s0 + $0xf8] sm:$0xff]
  %v49 = vld [vmem:[%s0 + $0x100] sm:$0xff]
  %v50 = vld [vmem:[%s0 + $0x108] sm:$0xff]
  %v51 = vld [vmem:[%s0 + $0x110] sm:$0xff]
  %v52 = vld [vmem:[%s0 + $0x118] sm:$0xff]
  %v53 = vld [vmem:[%s0 + $0x120] sm:$0xff]
  %v54 = vld [vmem:[%s0 + $0x128] sm:$0xff]
  %v55 = vld [vmem:[%s0 + $0x130] sm:$0xff]
  %v56 = vld [vmem:[%s0 + $0x138] sm:$0xff]
  %v57 = vld [vmem:[%s0 + $0x140] sm:$0xff]
  %v58 = vld [vmem:[%s0 + $0x148] sm:$0xff]
  %v59 = vld [vmem:[%s0 + $0x150] sm:$0xff]
  %v60 = vld [vmem:[%s0 + $0x158] sm:$0xff]
  %v61 = vld [vmem:[%s0 + $0x160] sm:$0xff]
  %v62 = vld [vmem:[%s0 + $0x168] sm:$0xff]
  %v63 = vld [vmem:[%s0 + $0x170] sm:$0xff]
  %v64 = vld [vmem:[%s0 + $0x178] sm:$0xff]
  %v65 = vld [vmem:[%s0 + $0x180] sm:$0xff]
  %v66 = vld [vmem:[%s0 + $0x188] sm:$0xff]
  %v67 = vld [vmem:[%s0 + $0x190] sm:$0xff]
  %v68 = vld [vmem:[%s0 + $0x198] sm:$0xff]
  %v69 = vld [vmem:[%s0 + $0x1a0] sm:$0xff]
  %v70 = vld [vmem:[%s0 + $0x1a8] sm:$0xff]
  %v71 = vld [vmem:[%s0 + $0x1b0] sm:$0xff]
  %v72 = vld [vmem:[%s0 + $0x1b8] sm:$0xff]
  %v73 = vld [vmem:[%s0 + $0x1c0] sm:$0xff]
  %v74 = vld [vmem:[%s0 + $0x1c8] sm:$0xff]
  %v75 = vld [vmem:[%s0 + $0x1d0] sm:$0xff]
  %v76 = vld [vmem:[%s0 + $0x1d8] sm:$0xff]
  %v77 = vld [vmem:[%s0 + $0x1e0] sm:$0xff]
  %v78 = vld [vmem:[%s0 + $0x1e8] sm:$0xff]
  %v79 = vld [vmem:[%s0 + $0x1f0] sm:$0xff]
  %v80 = vld [vmem:[%s0 + $0x1f8] sm:$0xff]
  %v81 = vld [vmem:[%s1] sm:$0xff]
  %v82 = vld [vmem:[%s1 + $0x8] sm:$0xff]
  %v83 = vld [vmem:[%s1 + $0x10] sm:$0xff]
  %v84 = vld [vmem:[%s1 + $0x18] sm:$0xff]
  %v85 = vld [vmem:[%s1 + $0x20] sm:$0xff]
  %v86 = vld [vmem:[%s1 + $0x28] sm:$0xff]
  %v87 = vld [vmem:[%s1 + $0x30] sm:$0xff]
  %v88 = vld [vmem:[%s1 + $0x38] sm:$0xff]
  %v89 = vld [vmem:[%s1 + $0x40] sm:$0xff]
  %v90 = vld [vmem:[%s1 + $0x48] sm:$0xff]
  %v91 = vld [vmem:[%s1 + $0x50] sm:$0xff]
  %v92 = vld [vmem:[%s1 + $0x58] sm:$0xff]
  %v93 = vld [vmem:[%s1 + $0x60] sm:$0xff]
  %v94 = vld [vmem:[%s1 + $0x68] sm:$0xff]
  %v95 = vld [vmem:[%s1 + $0x70] sm:$0xff]
  %v96 = vld [vmem:[%s1 + $0x78] sm:$0xff]
  %v97 = vld [vmem:[%s1 + $0x80] sm:$0xff]
  %v98 = vld [vmem:[%s1 + $0x88] sm:$0xff]
  %v99 = vld [vmem:[%s1 + $0x90] sm:$0xff]
  %v100 = vld [vmem:[%s1 + $0x98] sm:$0xff]
  %v101 = vld [vmem:[%s1 + $0xa0] sm:$0xff]
  %v102 = vld [vmem:[%s1 + $0xa8] sm:$0xff]
  %v103 = vld [vmem:[%s1 + $0xb0] sm:$0xff]
  %v104 = vld [vmem:[%s1 + $0xb8] sm:$0xff]
  %v105 = vld [vmem:[%s1 + $0xc0] sm:$0xff]
  %v106 = vld [vmem:[%s1 + $0xc8] sm:$0xff]
  %v107 = vld [vmem:[%s1 + $0xd0] sm:$0xff]
  %v108 = vld [vmem:[%s1 + $0xd8] sm:$0xff]
  %v109 = vld [vmem:[%s1 + $0xe0] sm:$0xff]
  %v110 = vld [vmem:[%s1 + $0xe8] sm:$0xff]
  %v111 = vld [vmem:[%s1 + $0xf0] sm:$0xff]
  %v112 = vld [vmem:[%s1 + $0xf8] sm:$0xff]
  %v113 = vld [vmem:[%s1 + $0x100] sm:$0xff]
  %v114 = vld [vmem:[%s1 + $0x108] sm:$0xff]
  %v115 = vld [vmem:[%s1 + $0x110] sm:$0xff]
  %v116 = vld [vmem:[%s1 + $0x118] sm:$0xff]
  %v117 = vld [vmem:[%s1 + $0x120] sm:$0xff]
  %v118 = vld [vmem:[%s1 + $0x128] sm:$0xff]
  %v119 = vld [vmem:[%s1 + $0x130] sm:$0xff]
  %v120 = vld [vmem:[%s1 + $0x138] sm:$0xff]
  %v121 = vld [vmem:[%s1 + $0x140] sm:$0xff]
  %v122 = vld [vmem:[%s1 + $0x148] sm:$0xff]
  %v123 = vld [vmem:[%s1 + $0x150] sm:$0xff]
  %v124 = vld [vmem:[%s1 + $0x158] sm:$0xff]
  %v125 = vld [vmem:[%s1 + $0x160] sm:$0xff]
  %v126 = vld [vmem:[%s1 + $0x168] sm:$0xff]
  %v127 = vld [vmem:[%s1 + $0x170] sm:$0xff]
  %v128 = vld [vmem:[%s1 + $0x178] sm:$0xff]
  %v129 = vld [vmem:[%s1 + $0x180] sm:$0xff]
  %v130 = vld [vmem:[%s1 + $0x188] sm:$0xff]
  %v131 = vld [vmem:[%s1 + $0x190] sm:$0xff]
  %v132 = vld [vmem:[%s1 + $0x198] sm:$0xff]
  %v133 = vld [vmem:[%s1 + $0x1a0] sm:$0xff]
  %v134 = vld [vmem:[%s1 + $0x1a8] sm:$0xff]
  %v135 = vld [vmem:[%s1 + $0x1b0] sm:$0xff]
  %v136 = vld [vmem:[%s1 + $0x1b8] sm:$0xff]
  %v137 = vld [vmem:[%s1 + $0x1c0] sm:$0xff]
  %v138 = vld [vmem:[%s1 + $0x1c8] sm:$0xff]
  %v139 = vld [vmem:[%s1 + $0x1d0] sm:$0xff]
  %v140 = vld [vmem:[%s1 + $0x1d8] sm:$0xff]
  %v141 = vld [vmem:[%s1 + $0x1e0] sm:$0xff]
  %v142 = vld [vmem:[%s1 + $0x1e8] sm:$0xff]
  %v143 = vld [vmem:[%s1 + $0x1f0] sm:$0xff]
  %v144 = vld [vmem:[%s1 + $0x1f8] sm:$0xff]
  %v145 = vadd.f32 %v17, %v81
  %v146 = vadd.f32 %v18, %v82
  %v147 = vadd.f32 %v19, %v83
  %v148 = vadd.f32 %v20, %v84
  %v149 = vadd.f32 %v21, %v85
  %v150 = vadd.f32 %v22, %v86
  %v151 = vadd.f32 %v23, %v87
  %v152 = vadd.f32 %v24, %v88
  %v153 = vadd.f32 %v25, %v89
  %v154 = vadd.f32 %v26, %v90
  %v155 = vadd.f32 %v27, %v91
  %v156 = vadd.f32 %v28, %v92
  %v157 = vadd.f32 %v29, %v93
  %v158 = vadd.f32 %v30, %v94
  %v159 = vadd.f32 %v31, %v95
  %v160 = vadd.f32 %v32, %v96
  %v161 = vadd.f32 %v33, %v97
  %v162 = vadd.f32 %v34, %v98
  %v163 = vadd.f32 %v35, %v99
  %v164 = vadd.f32 %v36, %v100
  %v165 = vadd.f32 %v37, %v101
  %v166 = vadd.f32 %v38, %v102
  %v167 = vadd.f32 %v39, %v103
  %v168 = vadd.f32 %v40, %v104
  %v169 = vadd.f32 %v41, %v105
  %v170 = vadd.f32 %v42, %v106
  %v171 = vadd.f32 %v43, %v107
  %v172 = vadd.f32 %v44, %v108
  %v173 = vadd.f32 %v45, %v109
  %v174 = vadd.f32 %v46, %v110
  %v175 = vadd.f32 %v47, %v111
  %v176 = vadd.f32 %v48, %v112
  %v177 = vadd.f32 %v49, %v113
  %v178 = vadd.f32 %v50, %v114
  %v179 = vadd.f32 %v51, %v115
  %v180 = vadd.f32 %v52, %v116
  %v181 = vadd.f32 %v53, %v117
  %v182 = vadd.f32 %v54, %v118
  %v183 = vadd.f32 %v55, %v119
  %v184 = vadd.f32 %v56, %v120
  %v185 = vadd.f32 %v57, %v121
  %v186 = vadd.f32 %v58, %v122
  %v187 = vadd.f32 %v59, %v123
  %v188 = vadd.f32 %v60, %v124
  %v189 = vadd.f32 %v61, %v125
  %v190 = vadd.f32 %v62, %v126
  %v191 = vadd.f32 %v63, %v127
  %v192 = vadd.f32 %v64, %v128
  %v193 = vadd.f32 %v65, %v129
  %v194 = vadd.f32 %v66, %v130
  %v195 = vadd.f32 %v67, %v131
  %v196 = vadd.f32 %v68, %v132
  %v197 = vadd.f32 %v69, %v133
  %v198 = vadd.f32 %v70, %v134
  %v199 = vadd.f32 %v71, %v135
  %v200 = vadd.f32 %v72, %v136
  %v201 = vadd.f32 %v73, %v137
  %v202 = vadd.f32 %v74, %v138
  %v203 = vadd.f32 %v75, %v139
  %v204 = vadd.f32 %v76, %v140
  %v205 = vadd.f32 %v77, %v141
  %v206 = vadd.f32 %v78, %v142
  %v207 = vadd.f32 %v79, %v143
  %v208 = vadd.f32 %v80, %v144
  %v209 = vld [vmem:[%s2] sm:$0xff]
  %v210 = vld [vmem:[%s2 + $0x8] sm:$0xff]
  %v211 = vld [vmem:[%s2 + $0x10] sm:$0xff]
  %v212 = vld [vmem:[%s2 + $0x18] sm:$0xff]
  %v213 = vld [vmem:[%s2 + $0x20] sm:$0xff]
  %v214 = vld [vmem:[%s2 + $0x28] sm:$0xff]
  %v215 = vld [vmem:[%s2 + $0x30] sm:$0xff]
  %v216 = vld [vmem:[%s2 + $0x38] sm:$0xff]
  %v217 = vld [vmem:[%s2 + $0x40] sm:$0xff]
  %v218 = vld [vmem:[%s2 + $0x48] sm:$0xff]
  %v219 = vld [vmem:[%s2 + $0x50] sm:$0xff]
  %v220 = vld [vmem:[%s2 + $0x58] sm:$0xff]
  %v221 = vld [vmem:[%s2 + $0x60] sm:$0xff]
  %v222 = vld [vmem:[%s2 + $0x68] sm:$0xff]
  %v223 = vld [vmem:[%s2 + $0x70] sm:$0xff]
  %v224 = vld [vmem:[%s2 + $0x78] sm:$0xff]
  %v225 = vld [vmem:[%s2 + $0x80] sm:$0xff]
  %v226 = vld [vmem:[%s2 + $0x88] sm:$0xff]
  %v227 = vld [vmem:[%s2 + $0x90] sm:$0xff]
  %v228 = vld [vmem:[%s2 + $0x98] sm:$0xff]
  %v229 = vld [vmem:[%s2 + $0xa0] sm:$0xff]
  %v230 = vld [vmem:[%s2 + $0xa8] sm:$0xff]
  %v231 = vld [vmem:[%s2 + $0xb0] sm:$0xff]
  %v232 = vld [vmem:[%s2 + $0xb8] sm:$0xff]
  %v233 = vld [vmem:[%s2 + $0xc0] sm:$0xff]
  %v234 = vld [vmem:[%s2 + $0xc8] sm:$0xff]
  %v235 = vld [vmem:[%s2 + $0xd0] sm:$0xff]
  %v236 = vld [vmem:[%s2 + $0xd8] sm:$0xff]
  %v237 = vld [vmem:[%s2 + $0xe0] sm:$0xff]
  %v238 = vld [vmem:[%s2 + $0xe8] sm:$0xff]
  %v239 = vld [vmem:[%s2 + $0xf0] sm:$0xff]
  %v240 = vld [vmem:[%s2 + $0xf8] sm:$0xff]
  %v241 = vld [vmem:[%s2 + $0x100] sm:$0xff]
  %v242 = vld [vmem:[%s2 + $0x108] sm:$0xff]
  %v243 = vld [vmem:[%s2 + $0x110] sm:$0xff]
  %v244 = vld [vmem:[%s2 + $0x118] sm:$0xff]
  %v245 = vld [vmem:[%s2 + $0x120] sm:$0xff]
  %v246 = vld [vmem:[%s2 + $0x128] sm:$0xff]
  %v247 = vld [vmem:[%s2 + $0x130] sm:$0xff]
  %v248 = vld [vmem:[%s2 + $0x138] sm:$0xff]
  %v249 = vld [vmem:[%s2 + $0x140] sm:$0xff]
  %v250 = vld [vmem:[%s2 + $0x148] sm:$0xff]
  %v251 = vld [vmem:[%s2 + $0x150] sm:$0xff]
  %v252 = vld [vmem:[%s2 + $0x158] sm:$0xff]
  %v253 = vld [vmem:[%s2 + $0x160] sm:$0xff]
  %v254 = vld [vmem:[%s2 + $0x168] sm:$0xff]
  %v255 = vld [vmem:[%s2 + $0x170] sm:$0xff]
  %v256 = vld [vmem:[%s2 + $0x178] sm:$0xff]
  %v257 = vld [vmem:[%s2 + $0x180] sm:$0xff]
  %v258 = vld [vmem:[%s2 + $0x188] sm:$0xff]
  %v259 = vld [vmem:[%s2 + $0x190] sm:$0xff]
  %v260 = vld [vmem:[%s2 + $0x198] sm:$0xff]
  %v261 = vld [vmem:[%s2 + $0x1a0] sm:$0xff]
  %v262 = vld [vmem:[%s2 + $0x1a8] sm:$0xff]
  %v263 = vld [vmem:[%s2 + $0x1b0] sm:$0xff]
  %v264 = vld [vmem:[%s2 + $0x1b8] sm:$0xff]
  %v265 = vld [vmem:[%s2 + $0x1c0] sm:$0xff]
  %v266 = vld [vmem:[%s2 + $0x1c8] sm:$0xff]
  %v267 = vld [vmem:[%s2 + $0x1d0] sm:$0xff]
  %v268 = vld [vmem:[%s2 + $0x1d8] sm:$0xff]
  %v269 = vld [vmem:[%s2 + $0x1e0] sm:$0xff]
  %v270 = vld [vmem:[%s2 + $0x1e8] sm:$0xff]
  %v271 = vld [vmem:[%s2 + $0x1f0] sm:$0xff]
  %v272 = vld [vmem:[%s2 + $0x1f8] sm:$0xff]
  %v273 = vadd.f32 %v145, %v209
  %v274 = vadd.f32 %v146, %v210
  %v275 = vadd.f32 %v147, %v211
  %v276 = vadd.f32 %v148, %v212
  %v277 = vadd.f32 %v149, %v213
  %v278 = vadd.f32 %v150, %v214
  %v279 = vadd.f32 %v151, %v215
  %v280 = vadd.f32 %v152, %v216
  %v281 = vadd.f32 %v153, %v217
  %v282 = vadd.f32 %v154, %v218
  %v283 = vadd.f32 %v155, %v219
  %v284 = vadd.f32 %v156, %v220
  %v285 = vadd.f32 %v157, %v221
  %v286 = vadd.f32 %v158, %v222
  %v287 = vadd.f32 %v159, %v223
  %v288 = vadd.f32 %v160, %v224
  %v289 = vadd.f32 %v161, %v225
  %v290 = vadd.f32 %v162, %v226
  %v291 = vadd.f32 %v163, %v227
  %v292 = vadd.f32 %v164, %v228
  %v293 = vadd.f32 %v165, %v229
  %v294 = vadd.f32 %v166, %v230
  %v295 = vadd.f32 %v167, %v231
  %v296 = vadd.f32 %v168, %v232
  %v297 = vadd.f32 %v169, %v233
  %v298 = vadd.f32 %v170, %v234
  %v299 = vadd.f32 %v171, %v235
  %v300 = vadd.f32 %v172, %v236
  %v301 = vadd.f32 %v173, %v237
  %v302 = vadd.f32 %v174, %v238
  %v303 = vadd.f32 %v175, %v239
  %v304 = vadd.f32 %v176, %v240
  %v305 = vadd.f32 %v177, %v241
  %v306 = vadd.f32 %v178, %v242
  %v307 = vadd.f32 %v179, %v243
  %v308 = vadd.f32 %v180, %v244
  %v309 = vadd.f32 %v181, %v245
  %v310 = vadd.f32 %v182, %v246
  %v311 = vadd.f32 %v183, %v247
  %v312 = vadd.f32 %v184, %v248
  %v313 = vadd.f32 %v185, %v249
  %v314 = vadd.f32 %v186, %v250
  %v315 = vadd.f32 %v187, %v251
  %v316 = vadd.f32 %v188, %v252
  %v317 = vadd.f32 %v189, %v253
  %v318 = vadd.f32 %v190, %v254
  %v319 = vadd.f32 %v191, %v255
  %v320 = vadd.f32 %v192, %v256
  %v321 = vadd.f32 %v193, %v257
  %v322 = vadd.f32 %v194, %v258
  %v323 = vadd.f32 %v195, %v259
  %v324 = vadd.f32 %v196, %v260
  %v325 = vadd.f32 %v197, %v261
  %v326 = vadd.f32 %v198, %v262
  %v327 = vadd.f32 %v199, %v263
  %v328 = vadd.f32 %v200, %v264
  %v329 = vadd.f32 %v201, %v265
  %v330 = vadd.f32 %v202, %v266
  %v331 = vadd.f32 %v203, %v267
  %v332 = vadd.f32 %v204, %v268
  %v333 = vadd.f32 %v205, %v269
  %v334 = vadd.f32 %v206, %v270
  %v335 = vadd.f32 %v207, %v271
  %v336 = vadd.f32 %v208, %v272
  %v337 = vld [vmem:[%s3] sm:$0xff]
  %v338 = vld [vmem:[%s3 + $0x8] sm:$0xff]
  %v339 = vld [vmem:[%s3 + $0x10] sm:$0xff]
  %v340 = vld [vmem:[%s3 + $0x18] sm:$0xff]
  %v341 = vld [vmem:[%s3 + $0x20] sm:$0xff]
  %v342 = vld [vmem:[%s3 + $0x28] sm:$0xff]
  %v343 = vld [vmem:[%s3 + $0x30] sm:$0xff]
  %v344 = vld [vmem:[%s3 + $0x38] sm:$0xff]
  %v345 = vld [vmem:[%s3 + $0x40] sm:$0xff]
  %v346 = vld [vmem:[%s3 + $0x48] sm:$0xff]
  %v347 = vld [vmem:[%s3 + $0x50] sm:$0xff]
  %v348 = vld [vmem:[%s3 + $0x58] sm:$0xff]
  %v349 = vld [vmem:[%s3 + $0x60] sm:$0xff]
  %v350 = vld [vmem:[%s3 + $0x68] sm:$0xff]
  %v351 = vld [vmem:[%s3 + $0x70] sm:$0xff]
  %v352 = vld [vmem:[%s3 + $0x78] sm:$0xff]
  %353 = vmatpush.msra.mxu0 %v352
  %354 = vmatpush.msra.mxu0 %v351
  %355 = vmatpush.msra.mxu0 %v350
  %356 = vmatpush.msra.mxu0 %v349
  %357 = vmatpush.msra.mxu0 %v348
  %358 = vmatpush.msra.mxu0 %v347
  %359 = vmatpush.msra.mxu0 %v346
  %360 = vmatpush.msra.mxu0 %v345
  %361 = vmatpush.msra.mxu0 %v344
  %362 = vmatpush.msra.mxu0 %v343
  %363 = vmatpush.msra.mxu0 %v342
  %364 = vmatpush.msra.mxu0 %v341
  %365 = vmatpush.msra.mxu0 %v340
  %366 = vmatpush.msra.mxu0 %v339
  %367 = vmatpush.msra.mxu0 %v338
  %368 = vmatpush.msra.mxu0 %v337
  %369 = vmatmul.f32.gmra.mxu0 %v273
  %v370 = vpop.f32.mrf.mxu0
  %v371 = vadd.f32 0.0, %v370
  %372 = vmatmul.f32.gmra.mxu0 %v274
  %v373 = vpop.f32.mrf.mxu0
  %v374 = vadd.f32 0.0, %v373
  %375 = vmatmul.f32.gmra.mxu0 %v275
  %v376 = vpop.f32.mrf.mxu0
  %v377 = vadd.f32 0.0, %v376
  %378 = vmatmul.f32.gmra.mxu0 %v276
  %v379 = vpop.f32.mrf.mxu0
  %v380 = vadd.f32 0.0, %v379
  %381 = vmatmul.f32.gmra.mxu0 %v277
  %v382 = vpop.f32.mrf.mxu0
  %v383 = vadd.f32 0.0, %v382
  %384 = vmatmul.f32.gmra.mxu0 %v278
  %v385 = vpop.f32.mrf.mxu0
  %v386 = vadd.f32 0.0, %v385
  %387 = vmatmul.f32.gmra.mxu0 %v279
  %v388 = vpop.f32.mrf.mxu0
  %v389 = vadd.f32 0.0, %v388
  %390 = vmatmul.f32.gmra.mxu0 %v280
  %v391 = vpop.f32.mrf.mxu0
  %v392 = vadd.f32 0.0, %v391
  %393 = vmatmul.f32.gmra.mxu0 %v281
  %v394 = vpop.f32.mrf.mxu0
  %v395 = vadd.f32 0.0, %v394
  %396 = vmatmul.f32.gmra.mxu0 %v282
  %v397 = vpop.f32.mrf.mxu0
  %v398 = vadd.f32 0.0, %v397
  %399 = vmatmul.f32.gmra.mxu0 %v283
  %v400 = vpop.f32.mrf.mxu0
  %v401 = vadd.f32 0.0, %v400
  %402 = vmatmul.f32.gmra.mxu0 %v284
  %v403 = vpop.f32.mrf.mxu0
  %v404 = vadd.f32 0.0, %v403
  %405 = vmatmul.f32.gmra.mxu0 %v285
  %v406 = vpop.f32.mrf.mxu0
  %v407 = vadd.f32 0.0, %v406
  %408 = vmatmul.f32.gmra.mxu0 %v286
  %v409 = vpop.f32.mrf.mxu0
  %v410 = vadd.f32 0.0, %v409
  %411 = vmatmul.f32.gmra.mxu0 %v287
  %v412 = vpop.f32.mrf.mxu0
  %v413 = vadd.f32 0.0, %v412
  %414 = vmatmul.f32.gmra.mxu0 %v288
  %v415 = vpop.f32.mrf.mxu0
  %v416 = vadd.f32 0.0, %v415
  %417 = vmatmul.f32.gmra.mxu0 %v289
  %v418 = vpop.f32.mrf.mxu0
  %v419 = vadd.f32 0.0, %v418
  %420 = vmatmul.f32.gmra.mxu0 %v290
  %v421 = vpop.f32.mrf.mxu0
  %v422 = vadd.f32 0.0, %v421
  %423 = vmatmul.f32.gmra.mxu0 %v291
  %v424 = vpop.f32.mrf.mxu0
  %v425 = vadd.f32 0.0, %v424
  %426 = vmatmul.f32.gmra.mxu0 %v292
  %v427 = vpop.f32.mrf.mxu0
  %v428 = vadd.f32 0.0, %v427
  %429 = vmatmul.f32.gmra.mxu0 %v293
  %v430 = vpop.f32.mrf.mxu0
  %v431 = vadd.f32 0.0, %v430
  %432 = vmatmul.f32.gmra.mxu0 %v294
  %v433 = vpop.f32.mrf.mxu0
  %v434 = vadd.f32 0.0, %v433
  %435 = vmatmul.f32.gmra.mxu0 %v295
  %v436 = vpop.f32.mrf.mxu0
  %v437 = vadd.f32 0.0, %v436
  %438 = vmatmul.f32.gmra.mxu0 %v296
  %v439 = vpop.f32.mrf.mxu0
  %v440 = vadd.f32 0.0, %v439
  %441 = vmatmul.f32.gmra.mxu0 %v297
  %v442 = vpop.f32.mrf.mxu0
  %v443 = vadd.f32 0.0, %v442
  %444 = vmatmul.f32.gmra.mxu0 %v298
  %v445 = vpop.f32.mrf.mxu0
  %v446 = vadd.f32 0.0, %v445
  %447 = vmatmul.f32.gmra.mxu0 %v299
  %v448 = vpop.f32.mrf.mxu0
  %v449 = vadd.f32 0.0, %v448
  %450 = vmatmul.f32.gmra.mxu0 %v300
  %v451 = vpop.f32.mrf.mxu0
  %v452 = vadd.f32 0.0, %v451
  %453 = vmatmul.f32.gmra.mxu0 %v301
  %v454 = vpop.f32.mrf.mxu0
  %v455 = vadd.f32 0.0, %v454
  %456 = vmatmul.f32.gmra.mxu0 %v302
  %v457 = vpop.f32.mrf.mxu0
  %v458 = vadd.f32 0.0, %v457
  %459 = vmatmul.f32.gmra.mxu0 %v303
  %v460 = vpop.f32.mrf.mxu0
  %v461 = vadd.f32 0.0, %v460
  %462 = vmatmul.f32.gmra.mxu0 %v304
  %v463 = vpop.f32.mrf.mxu0
  %v464 = vadd.f32 0.0, %v463
  %465 = vmatmul.f32.gmra.mxu0 %v305
  %v466 = vpop.f32.mrf.mxu0
  %v467 = vadd.f32 0.0, %v466
  %468 = vmatmul.f32.gmra.mxu0 %v306
  %v469 = vpop.f32.mrf.mxu0
  %v470 = vadd.f32 0.0, %v469
  %471 = vmatmul.f32.gmra.mxu0 %v307
  %v472 = vpop.f32.mrf.mxu0
  %v473 = vadd.f32 0.0, %v472
  %474 = vmatmul.f32.gmra.mxu0 %v308
  %v475 = vpop.f32.mrf.mxu0
  %v476 = vadd.f32 0.0, %v475
  %477 = vmatmul.f32.gmra.mxu0 %v309
  %v478 = vpop.f32.mrf.mxu0
  %v479 = vadd.f32 0.0, %v478
  %480 = vmatmul.f32.gmra.mxu0 %v310
  %v481 = vpop.f32.mrf.mxu0
  %v482 = vadd.f32 0.0, %v481
  %483 = vmatmul.f32.gmra.mxu0 %v311
  %v484 = vpop.f32.mrf.mxu0
  %v485 = vadd.f32 0.0, %v484
  %486 = vmatmul.f32.gmra.mxu0 %v312
  %v487 = vpop.f32.mrf.mxu0
  %v488 = vadd.f32 0.0, %v487
  %489 = vmatmul.f32.gmra.mxu0 %v313
  %v490 = vpop.f32.mrf.mxu0
  %v491 = vadd.f32 0.0, %v490
  %492 = vmatmul.f32.gmra.mxu0 %v314
  %v493 = vpop.f32.mrf.mxu0
  %v494 = vadd.f32 0.0, %v493
  %495 = vmatmul.f32.gmra.mxu0 %v315
  %v496 = vpop.f32.mrf.mxu0
  %v497 = vadd.f32 0.0, %v496
  %498 = vmatmul.f32.gmra.mxu0 %v316
  %v499 = vpop.f32.mrf.mxu0
  %v500 = vadd.f32 0.0, %v499
  %501 = vmatmul.f32.gmra.mxu0 %v317
  %v502 = vpop.f32.mrf.mxu0
  %v503 = vadd.f32 0.0, %v502
  %504 = vmatmul.f32.gmra.mxu0 %v318
  %v505 = vpop.f32.mrf.mxu0
  %v506 = vadd.f32 0.0, %v505
  %507 = vmatmul.f32.gmra.mxu0 %v319
  %v508 = vpop.f32.mrf.mxu0
  %v509 = vadd.f32 0.0, %v508
  %510 = vmatmul.f32.gmra.mxu0 %v320
  %v511 = vpop.f32.mrf.mxu0
  %v512 = vadd.f32 0.0, %v511
  %513 = vmatmul.f32.gmra.mxu0 %v321
  %v514 = vpop.f32.mrf.mxu0
  %v515 = vadd.f32 0.0, %v514
  %516 = vmatmul.f32.gmra.mxu0 %v322
  %v517 = vpop.f32.mrf.mxu0
  %v518 = vadd.f32 0.0, %v517
  %519 = vmatmul.f32.gmra.mxu0 %v323
  %v520 = vpop.f32.mrf.mxu0
  %v521 = vadd.f32 0.0, %v520
  %522 = vmatmul.f32.gmra.mxu0 %v324
  %v523 = vpop.f32.mrf.mxu0
  %v524 = vadd.f32 0.0, %v523
  %525 = vmatmul.f32.gmra.mxu0 %v325
  %v526 = vpop.f32.mrf.mxu0
  %v527 = vadd.f32 0.0, %v526
  %528 = vmatmul.f32.gmra.mxu0 %v326
  %v529 = vpop.f32.mrf.mxu0
  %v530 = vadd.f32 0.0, %v529
  %531 = vmatmul.f32.gmra.mxu0 %v327
  %v532 = vpop.f32.mrf.mxu0
  %v533 = vadd.f32 0.0, %v532
  %534 = vmatmul.f32.gmra.mxu0 %v328
  %v535 = vpop.f32.mrf.mxu0
  %v536 = vadd.f32 0.0, %v535
  %537 = vmatmul.f32.gmra.mxu0 %v329
  %v538 = vpop.f32.mrf.mxu0
  %v539 = vadd.f32 0.0, %v538
  %540 = vmatmul.f32.gmra.mxu0 %v330
  %v541 = vpop.f32.mrf.mxu0
  %v542 = vadd.f32 0.0, %v541
  %543 = vmatmul.f32.gmra.mxu0 %v331
  %v544 = vpop.f32.mrf.mxu0
  %v545 = vadd.f32 0.0, %v544
  %546 = vmatmul.f32.gmra.mxu0 %v332
  %v547 = vpop.f32.mrf.mxu0
  %v548 = vadd.f32 0.0, %v547
  %549 = vmatmul.f32.gmra.mxu0 %v333
  %v550 = vpop.f32.mrf.mxu0
  %v551 = vadd.f32 0.0, %v550
  %552 = vmatmul.f32.gmra.mxu0 %v334
  %v553 = vpop.f32.mrf.mxu0
  %v554 = vadd.f32 0.0, %v553
  %555 = vmatmul.f32.gmra.mxu0 %v335
  %v556 = vpop.f32.mrf.mxu0
  %v557 = vadd.f32 0.0, %v556
  %558 = vmatmul.f32.gmra.mxu0 %v336
  %v559 = vpop.f32.mrf.mxu0
  %v560 = vadd.f32 0.0, %v559
  %561 = vdwg.mxu0
  %562 = vst [vmem:[%s4] sm:$0xff] %v371
  %563 = vst [vmem:[%s4 + $0x8] sm:$0xff] %v374
  %564 = vst [vmem:[%s4 + $0x10] sm:$0xff] %v377
  %565 = vst [vmem:[%s4 + $0x18] sm:$0xff] %v380
  %566 = vst [vmem:[%s4 + $0x20] sm:$0xff] %v383
  %567 = vst [vmem:[%s4 + $0x28] sm:$0xff] %v386
  %568 = vst [vmem:[%s4 + $0x30] sm:$0xff] %v389
  %569 = vst [vmem:[%s4 + $0x38] sm:$0xff] %v392
  %570 = vst [vmem:[%s4 + $0x40] sm:$0xff] %v395
  %571 = vst [vmem:[%s4 + $0x48] sm:$0xff] %v398
  %572 = vst [vmem:[%s4 + $0x50] sm:$0xff] %v401
  %573 = vst [vmem:[%s4 + $0x58] sm:$0xff] %v404
  %574 = vst [vmem:[%s4 + $0x60] sm:$0xff] %v407
  %575 = vst [vmem:[%s4 + $0x68] sm:$0xff] %v410
  %576 = vst [vmem:[%s4 + $0x70] sm:$0xff] %v413
  %577 = vst [vmem:[%s4 + $0x78] sm:$0xff] %v416
  %578 = vst [vmem:[%s4 + $0x80] sm:$0xff] %v419
  %579 = vst [vmem:[%s4 + $0x88] sm:$0xff] %v422
  %580 = vst [vmem:[%s4 + $0x90] sm:$0xff] %v425
  %581 = vst [vmem:[%s4 + $0x98] sm:$0xff] %v428
  %582 = vst [vmem:[%s4 + $0xa0] sm:$0xff] %v431
  %583 = vst [vmem:[%s4 + $0xa8] sm:$0xff] %v434
  %584 = vst [vmem:[%s4 + $0xb0] sm:$0xff] %v437
  %585 = vst [vmem:[%s4 + $0xb8] sm:$0xff] %v440
  %586 = vst [vmem:[%s4 + $0xc0] sm:$0xff] %v443
  %587 = vst [vmem:[%s4 + $0xc8] sm:$0xff] %v446
  %588 = vst [vmem:[%s4 + $0xd0] sm:$0xff] %v449
  %589 = vst [vmem:[%s4 + $0xd8] sm:$0xff] %v452
  %590 = vst [vmem:[%s4 + $0xe0] sm:$0xff] %v455
  %591 = vst [vmem:[%s4 + $0xe8] sm:$0xff] %v458
  %592 = vst [vmem:[%s4 + $0xf0] sm:$0xff] %v461
  %593 = vst [vmem:[%s4 + $0xf8] sm:$0xff] %v464
  %594 = vst [vmem:[%s4 + $0x100] sm:$0xff] %v467
  %595 = vst [vmem:[%s4 + $0x108] sm:$0xff] %v470
  %596 = vst [vmem:[%s4 + $0x110] sm:$0xff] %v473
  %597 = vst [vmem:[%s4 + $0x118] sm:$0xff] %v476
  %598 = vst [vmem:[%s4 + $0x120] sm:$0xff] %v479
  %599 = vst [vmem:[%s4 + $0x128] sm:$0xff] %v482
  %600 = vst [vmem:[%s4 + $0x130] sm:$0xff] %v485
  %601 = vst [vmem:[%s4 + $0x138] sm:$0xff] %v488
  %602 = vst [vmem:[%s4 + $0x140] sm:$0xff] %v491
  %603 = vst [vmem:[%s4 + $0x148] sm:$0xff] %v494
  %604 = vst [vmem:[%s4 + $0x150] sm:$0xff] %v497
  %605 = vst [vmem:[%s4 + $0x158] sm:$0xff] %v500
  %606 = vst [vmem:[%s4 + $0x160] sm:$0xff] %v503
  %607 = vst [vmem:[%s4 + $0x168] sm:$0xff] %v506
  %608 = vst [vmem:[%s4 + $0x170] sm:$0xff] %v509
  %609 = vst [vmem:[%s4 + $0x178] sm:$0xff] %v512
  %610 = vst [vmem:[%s4 + $0x180] sm:$0xff] %v515
  %611 = vst [vmem:[%s4 + $0x188] sm:$0xff] %v518
  %612 = vst [vmem:[%s4 + $0x190] sm:$0xff] %v521
  %613 = vst [vmem:[%s4 + $0x198] sm:$0xff] %v524
  %614 = vst [vmem:[%s4 + $0x1a0] sm:$0xff] %v527
  %615 = vst [vmem:[%s4 + $0x1a8] sm:$0xff] %v530
  %616 = vst [vmem:[%s4 + $0x1b0] sm:$0xff] %v533
  %617 = vst [vmem:[%s4 + $0x1b8] sm:$0xff] %v536
  %618 = vst [vmem:[%s4 + $0x1c0] sm:$0xff] %v539
  %619 = vst [vmem:[%s4 + $0x1c8] sm:$0xff] %v542
  %620 = vst [vmem:[%s4 + $0x1d0] sm:$0xff] %v545
  %621 = vst [vmem:[%s4 + $0x1d8] sm:$0xff] %v548
  %622 = vst [vmem:[%s4 + $0x1e0] sm:$0xff] %v551
  %623 = vst [vmem:[%s4 + $0x1e8] sm:$0xff] %v554
  %624 = vst [vmem:[%s4 + $0x1f0] sm:$0xff] %v557
  %625 = vst [vmem:[%s4 + $0x1f8] sm:$0xff] %v560
  // Predicated region
  $region18: #{spectral_transform.7} parent=0 // pred_check
    _
  $region19: #{spectral_transform.7} parent=0 // pred_check_branch
    %627 = sbr.rel (0) target = $region21
  $region20: #{spectral_transform.7} parent=0 // pred_region
    _
  $region21: #{spectral_transform.7} parent=0 // pred_fallthru
    _
  // Predicated region
  $region22: #{spectral_transform.7} parent=0 // pred_check
    _
  $region23: #{spectral_transform.7} parent=0 // pred_check_branch
    %629 = sbr.rel (0) target = $region25
  $region24: #{spectral_transform.7} parent=0 // pred_region
    _
  $region25: #{spectral_transform.7} parent=0 // pred_fallthru
    _

</llo_original>
